<compile_context>
chip_gen: v7x
topology: tpu7x:2x2x1
jax: 0.10.0
libtpu: 0.0.40
codegen_flags: <defaults>
</compile_context>

<pallas_src>
import functools

import jax
import jax.numpy as jnp
import numpy as np
from jax.experimental import pallas as pl
from jax.experimental.pallas import tpu as pltpu


# ----------------------------- Pallas kernel -----------------------------
def _st_lstm_kernel(tok_ref, slab_ref, out_ref, *, T, B, H, V, NE,
                    epsilon, context_k):
    """Single-invocation LSTM + self-terminating head.

    tok_ref  : (B, T) int32 in SMEM (token ids)
    slab_ref : (NE + 2H + 1, 4H) f32 in VMEM, packed as
                 rows [0, NE)       : emb @ W_ih + b      (gate order i,f,o,g)
                 rows [NE, NE+H)    : W_hh                (gate order i,f,o,g)
                 rows [NE+H, NE+2H) : W_proj (eos last), lane-padded to 4H
                 row  [NE+2H]       : b_proj (eos last), lane-padded to 4H
    out_ref  : (T*B, V) f32 in VMEM, row r = t*B + b, cols = [non-eos..., eos]
    """
    TB = T * B

    # Weight views, loaded once (static, tile-aligned row slices).
    w_hh = slab_ref[NE:NE + H, :]                                   # (H, 4H)
    wp = slab_ref[NE + H:NE + 2 * H, :][:, :V]                      # (H, V)
    bp = slab_ref[NE + 2 * H:NE + 2 * H + 1, :][:, :V]              # (1, V)

    # ------------------ recurrence (serial, latency bound) ------------------
    h = jnp.zeros((B, H), jnp.float32)
    c = jnp.zeros((B, H), jnp.float32)
    hs = []
    for t in range(T):
        # Gather the precomputed input contribution x_t @ W_ih + b per token
        # (loads do not depend on h/c -> scheduler hoists them off the chain).
        rows = [slab_ref[pl.ds(tok_ref[b_i, t], 1), :] for b_i in range(B)]
        ih_t = rows[0] if B == 1 else jnp.concatenate(rows, axis=0)  # (B, 4H)

        if t == 0:
            gates = ih_t                      # h == 0 -> h @ W_hh == 0 exactly
        else:
            gates = ih_t + jnp.dot(h, w_hh, preferred_element_type=jnp.float32)

        sig = jax.nn.sigmoid(gates[:, :3 * H])            # i, f, o contiguous
        i_g = sig[:, 0 * H:1 * H]
        f_g = sig[:, 1 * H:2 * H]
        o_g = sig[:, 2 * H:3 * H]
        g_g = jnp.tanh(gates[:, 3 * H:4 * H])

        c = i_g * g_g if t == 0 else f_g * c + i_g * g_g
        h = o_g * jnp.tanh(c)
        hs.append(h)

    # --------------- vectorized epilogue (off the serial chain) -------------
    hstack = jnp.concatenate(hs, axis=0)                             # (T*B, H)
    logits = jnp.dot(hstack, wp,
                     preferred_element_type=jnp.float32) + bp        # (T*B, V)

    col = jax.lax.broadcasted_iota(jnp.int32, (TB, V), 1)
    is_eos = col == (V - 1)
    row = jax.lax.broadcasted_iota(jnp.int32, (TB, 1), 0)

    eos_logit = logits[:, V - 1:V]                                   # (TB, 1)
    beta = jnp.maximum((1.0 - epsilon) * jax.nn.sigmoid(eos_logit), 1e-10)
    # Reference forces beta = 1 (log beta = 0) for t < context_k.
    logbeta = jnp.where(row < context_k * B, 0.0, jnp.log(beta))     # (TB, 1)

    # Stride-B (per-batch) prefix sum over time: T exact f32 adds, unrolled.
    cums = []
    running = jnp.zeros((B, 1), jnp.float32)
    for t in range(T):
        running = running + logbeta[t * B:(t + 1) * B, :]
        cums.append(running)
    cumlog = jnp.concatenate(cums, axis=0)                           # (TB, 1)

    alpha = jnp.exp(cumlog)                                          # (TB, 1)
    p_eos = 1.0 - alpha

    # Softmax over the non-eos vocabulary (eos column masked out).
    masked = jnp.where(is_eos, -1e30, logits)
    mx = jnp.max(masked, axis=-1, keepdims=True)
    e = jnp.exp(masked - mx)                                         # 0 at eos
    p_v = alpha * e / jnp.sum(e, axis=-1, keepdims=True)             # exact div

    ps = jnp.where(is_eos, p_eos, p_v)                               # (TB, V)
    ps = jnp.maximum(ps, 1e-10)
    ps = ps / jnp.sum(ps, axis=-1, keepdims=True)                    # exact div
    out_ref[...] = jnp.log(ps)


# ------------------------- host-side weight packing -------------------------
def prepare_params(params, *, eos_idx):
    """Once-per-model: permute/fuse weights into a single 128-lane VMEM slab."""
    E, fourH = params["w_ih"].shape
    H = fourH // 4
    V = params["w_proj"].shape[1]

    # LSTM gate columns (i, f, g, o) -> (i, f, o, g): contiguous sigmoid/tanh.
    gate_perm = np.concatenate([np.arange(0, 2 * H),
                                np.arange(3 * H, 4 * H),
                                np.arange(2 * H, 3 * H)])
    w_ih = params["w_ih"][:, gate_perm]
    w_hh = params["w_hh"][:, gate_perm]
    b = params["b"][:, gate_perm]

    # Projection columns: eos column LAST (torch cat((p_V, p_eos), 2) order).
    col_perm = np.array([i for i in range(V) if i != eos_idx] + [eos_idx])
    w_proj = params["w_proj"][:, col_perm]
    b_proj = params["b_proj"][:, col_perm]

    # Fold embedding lookup + input matmul + gate bias into one table:
    # table_ih[v] = emb[v] @ W_ih + b   (rows independent => exact).
    table_ih = params["embedding"].astype(jnp.float32) @ w_ih + b   # (NE, 4H)

    def pad_lanes(x):
        return jnp.pad(x, ((0, 0), (0, fourH - x.shape[1])))

    slab = jnp.concatenate(
        [table_ih, w_hh, pad_lanes(w_proj), pad_lanes(b_proj)], axis=0
    ).astype(jnp.float32)                                            # (NE+2H+1, 4H)
    return slab


# ------------------------------ wrapper ------------------------------
def rnn_lm_st_forward(tokens, slab, *, num_embeddings, hidden_size, output_dim,
                      epsilon, context_k):
    B, T = tokens.shape
    H, V, NE = hidden_size, output_dim, num_embeddings

    kernel = functools.partial(_st_lstm_kernel, T=T, B=B, H=H, V=V, NE=NE,
                               epsilon=epsilon, context_k=context_k)
    out = pl.pallas_call(
        kernel,
        out_shape=jax.ShapeDtypeStruct((T * B, V), jnp.float32),
        in_specs=[pl.BlockSpec(memory_space=pltpu.MemorySpace.SMEM),   # tokens
                  pl.BlockSpec(memory_space=pltpu.MemorySpace.VMEM)],  # slab
        out_specs=pl.BlockSpec(memory_space=pltpu.MemorySpace.VMEM),
    )(tokens.astype(jnp.int32), slab)

    # (T*B, V) with row r = t*B + b  ->  (B, T, V).  Tiny transpose, outside
    # the kernel (fuses under jit); columns are already [non-eos..., eos].
    return out.reshape(T, B, V).swapaxes(0, 1)


# --------------------------- pure-JAX reference ---------------------------
def rnn_lm_st_reference(tokens, params, *, eos_idx, epsilon, context_k):
    emb = params["embedding"][tokens].astype(jnp.float32)       # (B, T, E)
    B, T, E = emb.shape
    H = params["w_hh"].shape[0]
    V = params["w_proj"].shape[1]

    def step(carry, x_t):
        h, c = carry
        g = x_t @ params["w_ih"] + h @ params["w_hh"] + params["b"][0]
        i_g = jax.nn.sigmoid(g[:, 0 * H:1 * H])
        f_g = jax.nn.sigmoid(g[:, 1 * H:2 * H])
        g_g = jnp.tanh(g[:, 2 * H:3 * H])
        o_g = jax.nn.sigmoid(g[:, 3 * H:4 * H])
        c = f_g * c + i_g * g_g
        h = o_g * jnp.tanh(c)
        return (h, c), h

    h0 = jnp.zeros((B, H), jnp.float32)
    _, hs = jax.lax.scan(step, (h0, h0), jnp.swapaxes(emb, 0, 1))
    output = jnp.swapaxes(hs, 0, 1)                              # (B, T, H)
    logits = output @ params["w_proj"] + params["b_proj"][0]     # (B, T, V)

    non_eos = np.array([i for i in range(V) if i != eos_idx])
    v_logits = logits[:, :, non_eos]
    eos_logits = logits[:, :, eos_idx:eos_idx + 1]
    bound = 1.0 - epsilon
    betas = jnp.clip(bound * jax.nn.sigmoid(eos_logits), 1e-10)
    if context_k > 0:
        betas = betas.at[:, :context_k].set(1.0)
    alphas = jnp.exp(jnp.cumsum(jnp.log(betas), axis=1))
    p_eoss = 1.0 - alphas
    p_Vs = alphas * jax.nn.softmax(v_logits, axis=-1)
    ps = jnp.concatenate((p_Vs, p_eoss), axis=2)
    ps = jnp.clip(ps, 1e-10)
    ps = ps / jnp.sum(ps, axis=-1, keepdims=True)
    return jnp.log(ps)


# ------------------------------ params ------------------------------
def init_params(key, *, num_embeddings, embedding_dim, hidden_size, output_dim,
                padding_idx):
    k = jax.random.split(key, 7)
    E, H, V = embedding_dim, hidden_size, output_dim
    s = 1.0 / np.sqrt(H)
    emb = jax.random.normal(k[0], (num_embeddings, E), jnp.float32)
    emb = emb.at[padding_idx].set(0.0)
    w_ih = jax.random.uniform(k[1], (E, 4 * H), jnp.float32, -s, s)
    w_hh = jax.random.uniform(k[2], (H, 4 * H), jnp.float32, -s, s)
    b_ih = jax.random.uniform(k[3], (1, 4 * H), jnp.float32, -s, s)
    b_hh = jax.random.uniform(k[4], (1, 4 * H), jnp.float32, -s, s)
    w_proj = jax.random.uniform(k[5], (H, V), jnp.float32, -s, s)
    b_proj = jax.random.uniform(k[6], (1, V), jnp.float32, -s, s)
    return {
        "embedding": emb, "w_ih": w_ih, "w_hh": w_hh, "b": b_ih + b_hh,
        "w_proj": w_proj, "b_proj": b_proj,
    }


if __name__ == "__main__":
    B, T = 2, 8
    NUM_EMB = 16          # vocab size == output_dim (V)
    E = 32                # embedding_dim == input_size
    H = 32                # hidden_size
    EOS_IDX = 3
    PAD_IDX = 0
    EPSILON = 0.01
    CONTEXT_K = 2
    # dropout = 0.0 → self.drop is the identity (exact match in eval/train).

    key = jax.random.PRNGKey(0)
    pkey, tkey = jax.random.split(key)
    params = init_params(pkey, num_embeddings=NUM_EMB, embedding_dim=E,
                         hidden_size=H, output_dim=NUM_EMB, padding_idx=PAD_IDX)
    tokens = jax.random.randint(tkey, (B, T), 0, NUM_EMB, dtype=jnp.int32)

    # One-time host-side packing (cached across calls in real use).
    slab = prepare_params(params, eos_idx=EOS_IDX)

    fwd = jax.jit(functools.partial(
        rnn_lm_st_forward, num_embeddings=NUM_EMB, hidden_size=H,
        output_dim=NUM_EMB, epsilon=EPSILON, context_k=CONTEXT_K))

    log_ps = jax.block_until_ready(fwd(tokens, slab))

    ref = rnn_lm_st_reference(tokens, params, eos_idx=EOS_IDX,
                              epsilon=EPSILON, context_k=CONTEXT_K)
    # Tolerance covers default-precision f32 MXU matmul differences between
    # the Mosaic kernel and the XLA reference (approx reciprocals removed).
    np.testing.assert_allclose(np.asarray(log_ps), np.asarray(ref),
                               rtol=2e-3, atol=2e-3)
    print("KERNEL_OK")
</pallas_src>

<mosaic_0001>
module attributes {stable_mosaic.version = 11 : i64} {
  func.func @_st_lstm_kernel(%arg0: memref<2x8xi32, #tpu.memory_space<smem>>, %arg1: memref<81x128xf32, #tpu.memory_space<vmem>>, %arg2: memref<16x16xf32, #tpu.memory_space<vmem>>) attributes {dimension_semantics = [], scalar_prefetch = 0 : i64, scratch_operands = 0 : i64, tpu.core_type = #tpu.core_type<tc>} {
    %c16 = arith.constant 16 : index
    %c0 = arith.constant 0 : index
    %0 = vector.load %arg1[%c16, %c0] : memref<81x128xf32, #tpu.memory_space<vmem>>, vector<32x128xf32>
    %c48 = arith.constant 48 : index
    %c0_0 = arith.constant 0 : index
    %1 = vector.load %arg1[%c48, %c0_0] : memref<81x128xf32, #tpu.memory_space<vmem>>, vector<32x128xf32>
    %2 = vector.extract_strided_slice %1 {offsets = [0, 0], sizes = [32, 16], strides = [1, 1]} : vector<32x128xf32> to vector<32x16xf32>
    %c80 = arith.constant 80 : index
    %c0_1 = arith.constant 0 : index
    %3 = vector.load %arg1[%c80, %c0_1] : memref<81x128xf32, #tpu.memory_space<vmem>>, vector<1x128xf32>
    %4 = vector.extract_strided_slice %3 {offsets = [0, 0], sizes = [1, 16], strides = [1, 1]} : vector<1x128xf32> to vector<1x16xf32>
    %c0_2 = arith.constant 0 : index
    %c0_3 = arith.constant 0 : index
    %5 = memref.load %arg0[%c0_2, %c0_3] : memref<2x8xi32, #tpu.memory_space<smem>>
    %6 = arith.index_cast %5 : i32 to index
    %c0_4 = arith.constant 0 : index
    %7 = vector.load %arg1[%6, %c0_4] : memref<81x128xf32, #tpu.memory_space<vmem>>, vector<1x128xf32>
    %c1 = arith.constant 1 : index
    %c0_5 = arith.constant 0 : index
    %8 = memref.load %arg0[%c1, %c0_5] : memref<2x8xi32, #tpu.memory_space<smem>>
    %9 = arith.index_cast %8 : i32 to index
    %c0_6 = arith.constant 0 : index
    %10 = vector.load %arg1[%9, %c0_6] : memref<81x128xf32, #tpu.memory_space<vmem>>, vector<1x128xf32>
    %11 = tpu.concatenate %7, %10 in 0 : vector<1x128xf32>, vector<1x128xf32> -> vector<2x128xf32>
    %12 = vector.extract_strided_slice %11 {offsets = [0, 0], sizes = [2, 96], strides = [1, 1]} : vector<2x128xf32> to vector<2x96xf32>
    %13 = arith.negf %12 : vector<2x96xf32>
    %14 = math.exp %13 : vector<2x96xf32>
    %cst = arith.constant 1.000000e+00 : f32
    %15 = vector.broadcast %cst : f32 to vector<2x96xf32>
    %16 = arith.addf %15, %14 : vector<2x96xf32>
    %17 = arith.divf %15, %16 : vector<2x96xf32>
    %18 = vector.extract_strided_slice %17 {offsets = [0, 0], sizes = [2, 32], strides = [1, 1]} : vector<2x96xf32> to vector<2x32xf32>
    %19 = vector.extract_strided_slice %17 {offsets = [0, 64], sizes = [2, 32], strides = [1, 1]} : vector<2x96xf32> to vector<2x32xf32>
    %20 = vector.extract_strided_slice %11 {offsets = [0, 96], sizes = [2, 32], strides = [1, 1]} : vector<2x128xf32> to vector<2x32xf32>
    %21 = math.tanh %20 : vector<2x32xf32>
    %22 = arith.mulf %18, %21 : vector<2x32xf32>
    %23 = math.tanh %22 : vector<2x32xf32>
    %24 = arith.mulf %19, %23 : vector<2x32xf32>
    %c0_7 = arith.constant 0 : index
    %c1_8 = arith.constant 1 : index
    %25 = memref.load %arg0[%c0_7, %c1_8] : memref<2x8xi32, #tpu.memory_space<smem>>
    %26 = arith.index_cast %25 : i32 to index
    %c0_9 = arith.constant 0 : index
    %27 = vector.load %arg1[%26, %c0_9] : memref<81x128xf32, #tpu.memory_space<vmem>>, vector<1x128xf32>
    %c1_10 = arith.constant 1 : index
    %c1_11 = arith.constant 1 : index
    %28 = memref.load %arg0[%c1_10, %c1_11] : memref<2x8xi32, #tpu.memory_space<smem>>
    %29 = arith.index_cast %28 : i32 to index
    %c0_12 = arith.constant 0 : index
    %30 = vector.load %arg1[%29, %c0_12] : memref<81x128xf32, #tpu.memory_space<vmem>>, vector<1x128xf32>
    %31 = tpu.concatenate %27, %30 in 0 : vector<1x128xf32>, vector<1x128xf32> -> vector<2x128xf32>
    %cst_13 = arith.constant dense<0.000000e+00> : vector<2x128xf32>
    %32 = tpu.matmul %24, %0, %cst_13 {dimension_numbers = #tpu.dot_dimension_numbers<[1], [0], [0], [1], [0, 0, 1, 1], [], []>} : vector<2x32xf32>, vector<32x128xf32>, vector<2x128xf32> -> vector<2x128xf32>
    %33 = arith.addf %31, %32 : vector<2x128xf32>
    %34 = vector.extract_strided_slice %33 {offsets = [0, 0], sizes = [2, 96], strides = [1, 1]} : vector<2x128xf32> to vector<2x96xf32>
    %35 = arith.negf %34 : vector<2x96xf32>
    %36 = math.exp %35 : vector<2x96xf32>
    %cst_14 = arith.constant 1.000000e+00 : f32
    %37 = vector.broadcast %cst_14 : f32 to vector<2x96xf32>
    %38 = arith.addf %37, %36 : vector<2x96xf32>
    %39 = arith.divf %37, %38 : vector<2x96xf32>
    %40 = vector.extract_strided_slice %39 {offsets = [0, 0], sizes = [2, 32], strides = [1, 1]} : vector<2x96xf32> to vector<2x32xf32>
    %41 = vector.extract_strided_slice %39 {offsets = [0, 32], sizes = [2, 32], strides = [1, 1]} : vector<2x96xf32> to vector<2x32xf32>
    %42 = vector.extract_strided_slice %39 {offsets = [0, 64], sizes = [2, 32], strides = [1, 1]} : vector<2x96xf32> to vector<2x32xf32>
    %43 = vector.extract_strided_slice %33 {offsets = [0, 96], sizes = [2, 32], strides = [1, 1]} : vector<2x128xf32> to vector<2x32xf32>
    %44 = math.tanh %43 : vector<2x32xf32>
    %45 = arith.mulf %41, %22 : vector<2x32xf32>
    %46 = arith.mulf %40, %44 : vector<2x32xf32>
    %47 = arith.addf %45, %46 : vector<2x32xf32>
    %48 = math.tanh %47 : vector<2x32xf32>
    %49 = arith.mulf %42, %48 : vector<2x32xf32>
    %c0_15 = arith.constant 0 : index
    %c2 = arith.constant 2 : index
    %50 = memref.load %arg0[%c0_15, %c2] : memref<2x8xi32, #tpu.memory_space<smem>>
    %51 = arith.index_cast %50 : i32 to index
    %c0_16 = arith.constant 0 : index
    %52 = vector.load %arg1[%51, %c0_16] : memref<81x128xf32, #tpu.memory_space<vmem>>, vector<1x128xf32>
    %c1_17 = arith.constant 1 : index
    %c2_18 = arith.constant 2 : index
    %53 = memref.load %arg0[%c1_17, %c2_18] : memref<2x8xi32, #tpu.memory_space<smem>>
    %54 = arith.index_cast %53 : i32 to index
    %c0_19 = arith.constant 0 : index
    %55 = vector.load %arg1[%54, %c0_19] : memref<81x128xf32, #tpu.memory_space<vmem>>, vector<1x128xf32>
    %56 = tpu.concatenate %52, %55 in 0 : vector<1x128xf32>, vector<1x128xf32> -> vector<2x128xf32>
    %cst_20 = arith.constant dense<0.000000e+00> : vector<2x128xf32>
    %57 = tpu.matmul %49, %0, %cst_20 {dimension_numbers = #tpu.dot_dimension_numbers<[1], [0], [0], [1], [0, 0, 1, 1], [], []>} : vector<2x32xf32>, vector<32x128xf32>, vector<2x128xf32> -> vector<2x128xf32>
    %58 = arith.addf %56, %57 : vector<2x128xf32>
    %59 = vector.extract_strided_slice %58 {offsets = [0, 0], sizes = [2, 96], strides = [1, 1]} : vector<2x128xf32> to vector<2x96xf32>
    %60 = arith.negf %59 : vector<2x96xf32>
    %61 = math.exp %60 : vector<2x96xf32>
    %cst_21 = arith.constant 1.000000e+00 : f32
    %62 = vector.broadcast %cst_21 : f32 to vector<2x96xf32>
    %63 = arith.addf %62, %61 : vector<2x96xf32>
    %64 = arith.divf %62, %63 : vector<2x96xf32>
    %65 = vector.extract_strided_slice %64 {offsets = [0, 0], sizes = [2, 32], strides = [1, 1]} : vector<2x96xf32> to vector<2x32xf32>
    %66 = vector.extract_strided_slice %64 {offsets = [0, 32], sizes = [2, 32], strides = [1, 1]} : vector<2x96xf32> to vector<2x32xf32>
    %67 = vector.extract_strided_slice %64 {offsets = [0, 64], sizes = [2, 32], strides = [1, 1]} : vector<2x96xf32> to vector<2x32xf32>
    %68 = vector.extract_strided_slice %58 {offsets = [0, 96], sizes = [2, 32], strides = [1, 1]} : vector<2x128xf32> to vector<2x32xf32>
    %69 = math.tanh %68 : vector<2x32xf32>
    %70 = arith.mulf %66, %47 : vector<2x32xf32>
    %71 = arith.mulf %65, %69 : vector<2x32xf32>
    %72 = arith.addf %70, %71 : vector<2x32xf32>
    %73 = math.tanh %72 : vector<2x32xf32>
    %74 = arith.mulf %67, %73 : vector<2x32xf32>
    %c0_22 = arith.constant 0 : index
    %c3 = arith.constant 3 : index
    %75 = memref.load %arg0[%c0_22, %c3] : memref<2x8xi32, #tpu.memory_space<smem>>
    %76 = arith.index_cast %75 : i32 to index
    %c0_23 = arith.constant 0 : index
    %77 = vector.load %arg1[%76, %c0_23] : memref<81x128xf32, #tpu.memory_space<vmem>>, vector<1x128xf32>
    %c1_24 = arith.constant 1 : index
    %c3_25 = arith.constant 3 : index
    %78 = memref.load %arg0[%c1_24, %c3_25] : memref<2x8xi32, #tpu.memory_space<smem>>
    %79 = arith.index_cast %78 : i32 to index
    %c0_26 = arith.constant 0 : index
    %80 = vector.load %arg1[%79, %c0_26] : memref<81x128xf32, #tpu.memory_space<vmem>>, vector<1x128xf32>
    %81 = tpu.concatenate %77, %80 in 0 : vector<1x128xf32>, vector<1x128xf32> -> vector<2x128xf32>
    %cst_27 = arith.constant dense<0.000000e+00> : vector<2x128xf32>
    %82 = tpu.matmul %74, %0, %cst_27 {dimension_numbers = #tpu.dot_dimension_numbers<[1], [0], [0], [1], [0, 0, 1, 1], [], []>} : vector<2x32xf32>, vector<32x128xf32>, vector<2x128xf32> -> vector<2x128xf32>
    %83 = arith.addf %81, %82 : vector<2x128xf32>
    %84 = vector.extract_strided_slice %83 {offsets = [0, 0], sizes = [2, 96], strides = [1, 1]} : vector<2x128xf32> to vector<2x96xf32>
    %85 = arith.negf %84 : vector<2x96xf32>
    %86 = math.exp %85 : vector<2x96xf32>
    %cst_28 = arith.constant 1.000000e+00 : f32
    %87 = vector.broadcast %cst_28 : f32 to vector<2x96xf32>
    %88 = arith.addf %87, %86 : vector<2x96xf32>
    %89 = arith.divf %87, %88 : vector<2x96xf32>
    %90 = vector.extract_strided_slice %89 {offsets = [0, 0], sizes = [2, 32], strides = [1, 1]} : vector<2x96xf32> to vector<2x32xf32>
    %91 = vector.extract_strided_slice %89 {offsets = [0, 32], sizes = [2, 32], strides = [1, 1]} : vector<2x96xf32> to vector<2x32xf32>
    %92 = vector.extract_strided_slice %89 {offsets = [0, 64], sizes = [2, 32], strides = [1, 1]} : vector<2x96xf32> to vector<2x32xf32>
    %93 = vector.extract_strided_slice %83 {offsets = [0, 96], sizes = [2, 32], strides = [1, 1]} : vector<2x128xf32> to vector<2x32xf32>
    %94 = math.tanh %93 : vector<2x32xf32>
    %95 = arith.mulf %91, %72 : vector<2x32xf32>
    %96 = arith.mulf %90, %94 : vector<2x32xf32>
    %97 = arith.addf %95, %96 : vector<2x32xf32>
    %98 = math.tanh %97 : vector<2x32xf32>
    %99 = arith.mulf %92, %98 : vector<2x32xf32>
    %c0_29 = arith.constant 0 : index
    %c4 = arith.constant 4 : index
    %100 = memref.load %arg0[%c0_29, %c4] : memref<2x8xi32, #tpu.memory_space<smem>>
    %101 = arith.index_cast %100 : i32 to index
    %c0_30 = arith.constant 0 : index
    %102 = vector.load %arg1[%101, %c0_30] : memref<81x128xf32, #tpu.memory_space<vmem>>, vector<1x128xf32>
    %c1_31 = arith.constant 1 : index
    %c4_32 = arith.constant 4 : index
    %103 = memref.load %arg0[%c1_31, %c4_32] : memref<2x8xi32, #tpu.memory_space<smem>>
    %104 = arith.index_cast %103 : i32 to index
    %c0_33 = arith.constant 0 : index
    %105 = vector.load %arg1[%104, %c0_33] : memref<81x128xf32, #tpu.memory_space<vmem>>, vector<1x128xf32>
    %106 = tpu.concatenate %102, %105 in 0 : vector<1x128xf32>, vector<1x128xf32> -> vector<2x128xf32>
    %cst_34 = arith.constant dense<0.000000e+00> : vector<2x128xf32>
    %107 = tpu.matmul %99, %0, %cst_34 {dimension_numbers = #tpu.dot_dimension_numbers<[1], [0], [0], [1], [0, 0, 1, 1], [], []>} : vector<2x32xf32>, vector<32x128xf32>, vector<2x128xf32> -> vector<2x128xf32>
    %108 = arith.addf %106, %107 : vector<2x128xf32>
    %109 = vector.extract_strided_slice %108 {offsets = [0, 0], sizes = [2, 96], strides = [1, 1]} : vector<2x128xf32> to vector<2x96xf32>
    %110 = arith.negf %109 : vector<2x96xf32>
    %111 = math.exp %110 : vector<2x96xf32>
    %cst_35 = arith.constant 1.000000e+00 : f32
    %112 = vector.broadcast %cst_35 : f32 to vector<2x96xf32>
    %113 = arith.addf %112, %111 : vector<2x96xf32>
    %114 = arith.divf %112, %113 : vector<2x96xf32>
    %115 = vector.extract_strided_slice %114 {offsets = [0, 0], sizes = [2, 32], strides = [1, 1]} : vector<2x96xf32> to vector<2x32xf32>
    %116 = vector.extract_strided_slice %114 {offsets = [0, 32], sizes = [2, 32], strides = [1, 1]} : vector<2x96xf32> to vector<2x32xf32>
    %117 = vector.extract_strided_slice %114 {offsets = [0, 64], sizes = [2, 32], strides = [1, 1]} : vector<2x96xf32> to vector<2x32xf32>
    %118 = vector.extract_strided_slice %108 {offsets = [0, 96], sizes = [2, 32], strides = [1, 1]} : vector<2x128xf32> to vector<2x32xf32>
    %119 = math.tanh %118 : vector<2x32xf32>
    %120 = arith.mulf %116, %97 : vector<2x32xf32>
    %121 = arith.mulf %115, %119 : vector<2x32xf32>
    %122 = arith.addf %120, %121 : vector<2x32xf32>
    %123 = math.tanh %122 : vector<2x32xf32>
    %124 = arith.mulf %117, %123 : vector<2x32xf32>
    %c0_36 = arith.constant 0 : index
    %c5 = arith.constant 5 : index
    %125 = memref.load %arg0[%c0_36, %c5] : memref<2x8xi32, #tpu.memory_space<smem>>
    %126 = arith.index_cast %125 : i32 to index
    %c0_37 = arith.constant 0 : index
    %127 = vector.load %arg1[%126, %c0_37] : memref<81x128xf32, #tpu.memory_space<vmem>>, vector<1x128xf32>
    %c1_38 = arith.constant 1 : index
    %c5_39 = arith.constant 5 : index
    %128 = memref.load %arg0[%c1_38, %c5_39] : memref<2x8xi32, #tpu.memory_space<smem>>
    %129 = arith.index_cast %128 : i32 to index
    %c0_40 = arith.constant 0 : index
    %130 = vector.load %arg1[%129, %c0_40] : memref<81x128xf32, #tpu.memory_space<vmem>>, vector<1x128xf32>
    %131 = tpu.concatenate %127, %130 in 0 : vector<1x128xf32>, vector<1x128xf32> -> vector<2x128xf32>
    %cst_41 = arith.constant dense<0.000000e+00> : vector<2x128xf32>
    %132 = tpu.matmul %124, %0, %cst_41 {dimension_numbers = #tpu.dot_dimension_numbers<[1], [0], [0], [1], [0, 0, 1, 1], [], []>} : vector<2x32xf32>, vector<32x128xf32>, vector<2x128xf32> -> vector<2x128xf32>
    %133 = arith.addf %131, %132 : vector<2x128xf32>
    %134 = vector.extract_strided_slice %133 {offsets = [0, 0], sizes = [2, 96], strides = [1, 1]} : vector<2x128xf32> to vector<2x96xf32>
    %135 = arith.negf %134 : vector<2x96xf32>
    %136 = math.exp %135 : vector<2x96xf32>
    %cst_42 = arith.constant 1.000000e+00 : f32
    %137 = vector.broadcast %cst_42 : f32 to vector<2x96xf32>
    %138 = arith.addf %137, %136 : vector<2x96xf32>
    %139 = arith.divf %137, %138 : vector<2x96xf32>
    %140 = vector.extract_strided_slice %139 {offsets = [0, 0], sizes = [2, 32], strides = [1, 1]} : vector<2x96xf32> to vector<2x32xf32>
    %141 = vector.extract_strided_slice %139 {offsets = [0, 32], sizes = [2, 32], strides = [1, 1]} : vector<2x96xf32> to vector<2x32xf32>
    %142 = vector.extract_strided_slice %139 {offsets = [0, 64], sizes = [2, 32], strides = [1, 1]} : vector<2x96xf32> to vector<2x32xf32>
    %143 = vector.extract_strided_slice %133 {offsets = [0, 96], sizes = [2, 32], strides = [1, 1]} : vector<2x128xf32> to vector<2x32xf32>
    %144 = math.tanh %143 : vector<2x32xf32>
    %145 = arith.mulf %141, %122 : vector<2x32xf32>
    %146 = arith.mulf %140, %144 : vector<2x32xf32>
    %147 = arith.addf %145, %146 : vector<2x32xf32>
    %148 = math.tanh %147 : vector<2x32xf32>
    %149 = arith.mulf %142, %148 : vector<2x32xf32>
    %c0_43 = arith.constant 0 : index
    %c6 = arith.constant 6 : index
    %150 = memref.load %arg0[%c0_43, %c6] : memref<2x8xi32, #tpu.memory_space<smem>>
    %151 = arith.index_cast %150 : i32 to index
    %c0_44 = arith.constant 0 : index
    %152 = vector.load %arg1[%151, %c0_44] : memref<81x128xf32, #tpu.memory_space<vmem>>, vector<1x128xf32>
    %c1_45 = arith.constant 1 : index
    %c6_46 = arith.constant 6 : index
    %153 = memref.load %arg0[%c1_45, %c6_46] : memref<2x8xi32, #tpu.memory_space<smem>>
    %154 = arith.index_cast %153 : i32 to index
    %c0_47 = arith.constant 0 : index
    %155 = vector.load %arg1[%154, %c0_47] : memref<81x128xf32, #tpu.memory_space<vmem>>, vector<1x128xf32>
    %156 = tpu.concatenate %152, %155 in 0 : vector<1x128xf32>, vector<1x128xf32> -> vector<2x128xf32>
    %cst_48 = arith.constant dense<0.000000e+00> : vector<2x128xf32>
    %157 = tpu.matmul %149, %0, %cst_48 {dimension_numbers = #tpu.dot_dimension_numbers<[1], [0], [0], [1], [0, 0, 1, 1], [], []>} : vector<2x32xf32>, vector<32x128xf32>, vector<2x128xf32> -> vector<2x128xf32>
    %158 = arith.addf %156, %157 : vector<2x128xf32>
    %159 = vector.extract_strided_slice %158 {offsets = [0, 0], sizes = [2, 96], strides = [1, 1]} : vector<2x128xf32> to vector<2x96xf32>
    %160 = arith.negf %159 : vector<2x96xf32>
    %161 = math.exp %160 : vector<2x96xf32>
    %cst_49 = arith.constant 1.000000e+00 : f32
    %162 = vector.broadcast %cst_49 : f32 to vector<2x96xf32>
    %163 = arith.addf %162, %161 : vector<2x96xf32>
    %164 = arith.divf %162, %163 : vector<2x96xf32>
    %165 = vector.extract_strided_slice %164 {offsets = [0, 0], sizes = [2, 32], strides = [1, 1]} : vector<2x96xf32> to vector<2x32xf32>
    %166 = vector.extract_strided_slice %164 {offsets = [0, 32], sizes = [2, 32], strides = [1, 1]} : vector<2x96xf32> to vector<2x32xf32>
    %167 = vector.extract_strided_slice %164 {offsets = [0, 64], sizes = [2, 32], strides = [1, 1]} : vector<2x96xf32> to vector<2x32xf32>
    %168 = vector.extract_strided_slice %158 {offsets = [0, 96], sizes = [2, 32], strides = [1, 1]} : vector<2x128xf32> to vector<2x32xf32>
    %169 = math.tanh %168 : vector<2x32xf32>
    %170 = arith.mulf %166, %147 : vector<2x32xf32>
    %171 = arith.mulf %165, %169 : vector<2x32xf32>
    %172 = arith.addf %170, %171 : vector<2x32xf32>
    %173 = math.tanh %172 : vector<2x32xf32>
    %174 = arith.mulf %167, %173 : vector<2x32xf32>
    %c0_50 = arith.constant 0 : index
    %c7 = arith.constant 7 : index
    %175 = memref.load %arg0[%c0_50, %c7] : memref<2x8xi32, #tpu.memory_space<smem>>
    %176 = arith.index_cast %175 : i32 to index
    %c0_51 = arith.constant 0 : index
    %177 = vector.load %arg1[%176, %c0_51] : memref<81x128xf32, #tpu.memory_space<vmem>>, vector<1x128xf32>
    %c1_52 = arith.constant 1 : index
    %c7_53 = arith.constant 7 : index
    %178 = memref.load %arg0[%c1_52, %c7_53] : memref<2x8xi32, #tpu.memory_space<smem>>
    %179 = arith.index_cast %178 : i32 to index
    %c0_54 = arith.constant 0 : index
    %180 = vector.load %arg1[%179, %c0_54] : memref<81x128xf32, #tpu.memory_space<vmem>>, vector<1x128xf32>
    %181 = tpu.concatenate %177, %180 in 0 : vector<1x128xf32>, vector<1x128xf32> -> vector<2x128xf32>
    %cst_55 = arith.constant dense<0.000000e+00> : vector<2x128xf32>
    %182 = tpu.matmul %174, %0, %cst_55 {dimension_numbers = #tpu.dot_dimension_numbers<[1], [0], [0], [1], [0, 0, 1, 1], [], []>} : vector<2x32xf32>, vector<32x128xf32>, vector<2x128xf32> -> vector<2x128xf32>
    %183 = arith.addf %181, %182 : vector<2x128xf32>
    %184 = vector.extract_strided_slice %183 {offsets = [0, 0], sizes = [2, 96], strides = [1, 1]} : vector<2x128xf32> to vector<2x96xf32>
    %185 = arith.negf %184 : vector<2x96xf32>
    %186 = math.exp %185 : vector<2x96xf32>
    %cst_56 = arith.constant 1.000000e+00 : f32
    %187 = vector.broadcast %cst_56 : f32 to vector<2x96xf32>
    %188 = arith.addf %187, %186 : vector<2x96xf32>
    %189 = arith.divf %187, %188 : vector<2x96xf32>
    %190 = vector.extract_strided_slice %189 {offsets = [0, 0], sizes = [2, 32], strides = [1, 1]} : vector<2x96xf32> to vector<2x32xf32>
    %191 = vector.extract_strided_slice %189 {offsets = [0, 32], sizes = [2, 32], strides = [1, 1]} : vector<2x96xf32> to vector<2x32xf32>
    %192 = vector.extract_strided_slice %189 {offsets = [0, 64], sizes = [2, 32], strides = [1, 1]} : vector<2x96xf32> to vector<2x32xf32>
    %193 = vector.extract_strided_slice %183 {offsets = [0, 96], sizes = [2, 32], strides = [1, 1]} : vector<2x128xf32> to vector<2x32xf32>
    %194 = math.tanh %193 : vector<2x32xf32>
    %195 = arith.mulf %191, %172 : vector<2x32xf32>
    %196 = arith.mulf %190, %194 : vector<2x32xf32>
    %197 = arith.addf %195, %196 : vector<2x32xf32>
    %198 = math.tanh %197 : vector<2x32xf32>
    %199 = arith.mulf %192, %198 : vector<2x32xf32>
    %200 = tpu.concatenate %24, %49, %74, %99, %124, %149, %174, %199 in 0 : vector<2x32xf32>, vector<2x32xf32>, vector<2x32xf32>, vector<2x32xf32>, vector<2x32xf32>, vector<2x32xf32>, vector<2x32xf32>, vector<2x32xf32> -> vector<16x32xf32>
    %cst_57 = arith.constant dense<0.000000e+00> : vector<16x16xf32>
    %201 = tpu.matmul %200, %2, %cst_57 {dimension_numbers = #tpu.dot_dimension_numbers<[1], [0], [0], [1], [0, 0, 1, 1], [], []>} : vector<16x32xf32>, vector<32x16xf32>, vector<16x16xf32> -> vector<16x16xf32>
    %202 = vector.broadcast %4 : vector<1x16xf32> to vector<16x16xf32>
    %203 = arith.addf %201, %202 : vector<16x16xf32>
    %204 = tpu.iota {dimensions = array<i32: 1>} : vector<16x16xi32>
    %c15_i32 = arith.constant 15 : i32
    %205 = vector.broadcast %c15_i32 : i32 to vector<16x16xi32>
    %206 = arith.cmpi eq, %204, %205 : vector<16x16xi32>
    %207 = tpu.iota {dimensions = array<i32: 0>} : vector<16x1xi32>
    %208 = vector.extract_strided_slice %203 {offsets = [0, 15], sizes = [16, 1], strides = [1, 1]} : vector<16x16xf32> to vector<16x1xf32>
    %209 = arith.negf %208 : vector<16x1xf32>
    %210 = math.exp %209 : vector<16x1xf32>
    %cst_58 = arith.constant 1.000000e+00 : f32
    %211 = vector.broadcast %cst_58 : f32 to vector<16x1xf32>
    %212 = arith.addf %211, %210 : vector<16x1xf32>
    %213 = arith.divf %211, %212 : vector<16x1xf32>
    %cst_59 = arith.constant 9.900000e-01 : f32
    %214 = vector.broadcast %cst_59 : f32 to vector<16x1xf32>
    %215 = arith.mulf %214, %213 : vector<16x1xf32>
    %cst_60 = arith.constant 1.000000e-10 : f32
    %216 = vector.broadcast %cst_60 : f32 to vector<16x1xf32>
    %217 = arith.maximumf %215, %216 : vector<16x1xf32>
    %c4_i32 = arith.constant 4 : i32
    %218 = vector.broadcast %c4_i32 : i32 to vector<16x1xi32>
    %219 = arith.cmpi slt, %207, %218 : vector<16x1xi32>
    %220 = math.log %217 : vector<16x1xf32>
    %cst_61 = arith.constant 0.000000e+00 : f32
    %221 = vector.broadcast %cst_61 : f32 to vector<16x1xf32>
    %222 = arith.select %219, %221, %220 : vector<16x1xi1>, vector<16x1xf32>
    %cst_62 = arith.constant 0.000000e+00 : f32
    %223 = vector.broadcast %cst_62 : f32 to vector<2x1xf32>
    %224 = vector.extract_strided_slice %222 {offsets = [0, 0], sizes = [2, 1], strides = [1, 1]} : vector<16x1xf32> to vector<2x1xf32>
    %225 = arith.addf %223, %224 : vector<2x1xf32>
    %226 = vector.extract_strided_slice %222 {offsets = [2, 0], sizes = [2, 1], strides = [1, 1]} : vector<16x1xf32> to vector<2x1xf32>
    %227 = arith.addf %225, %226 : vector<2x1xf32>
    %228 = vector.extract_strided_slice %222 {offsets = [4, 0], sizes = [2, 1], strides = [1, 1]} : vector<16x1xf32> to vector<2x1xf32>
    %229 = arith.addf %227, %228 : vector<2x1xf32>
    %230 = vector.extract_strided_slice %222 {offsets = [6, 0], sizes = [2, 1], strides = [1, 1]} : vector<16x1xf32> to vector<2x1xf32>
    %231 = arith.addf %229, %230 : vector<2x1xf32>
    %232 = vector.extract_strided_slice %222 {offsets = [8, 0], sizes = [2, 1], strides = [1, 1]} : vector<16x1xf32> to vector<2x1xf32>
    %233 = arith.addf %231, %232 : vector<2x1xf32>
    %234 = vector.extract_strided_slice %222 {offsets = [10, 0], sizes = [2, 1], strides = [1, 1]} : vector<16x1xf32> to vector<2x1xf32>
    %235 = arith.addf %233, %234 : vector<2x1xf32>
    %236 = vector.extract_strided_slice %222 {offsets = [12, 0], sizes = [2, 1], strides = [1, 1]} : vector<16x1xf32> to vector<2x1xf32>
    %237 = arith.addf %235, %236 : vector<2x1xf32>
    %238 = vector.extract_strided_slice %222 {offsets = [14, 0], sizes = [2, 1], strides = [1, 1]} : vector<16x1xf32> to vector<2x1xf32>
    %239 = arith.addf %237, %238 : vector<2x1xf32>
    %240 = tpu.concatenate %225, %227, %229, %231, %233, %235, %237, %239 in 0 : vector<2x1xf32>, vector<2x1xf32>, vector<2x1xf32>, vector<2x1xf32>, vector<2x1xf32>, vector<2x1xf32>, vector<2x1xf32>, vector<2x1xf32> -> vector<16x1xf32>
    %241 = math.exp %240 : vector<16x1xf32>
    %cst_63 = arith.constant 1.000000e+00 : f32
    %242 = vector.broadcast %cst_63 : f32 to vector<16x1xf32>
    %243 = arith.subf %242, %241 : vector<16x1xf32>
    %cst_64 = arith.constant -1.000000e+30 : f32
    %244 = vector.broadcast %cst_64 : f32 to vector<16x16xf32>
    %245 = arith.select %206, %244, %203 : vector<16x16xi1>, vector<16x16xf32>
    %cst_65 = arith.constant dense<0xFF800000> : vector<16xf32>
    %246 = vector.multi_reduction <maximumf>, %245, %cst_65 [1] : vector<16x16xf32> to vector<16xf32>
    %247 = vector.shape_cast %246 : vector<16xf32> to vector<16x1xf32>
    %248 = vector.broadcast %247 : vector<16x1xf32> to vector<16x16xf32>
    %249 = arith.subf %245, %248 : vector<16x16xf32>
    %250 = math.exp %249 : vector<16x16xf32>
    %251 = vector.broadcast %241 : vector<16x1xf32> to vector<16x16xf32>
    %252 = arith.mulf %251, %250 : vector<16x16xf32>
    %cst_66 = arith.constant dense<0.000000e+00> : vector<16xf32>
    %253 = vector.multi_reduction <add>, %250, %cst_66 [1] : vector<16x16xf32> to vector<16xf32>
    %254 = vector.shape_cast %253 : vector<16xf32> to vector<16x1xf32>
    %255 = vector.broadcast %254 : vector<16x1xf32> to vector<16x16xf32>
    %256 = arith.divf %252, %255 : vector<16x16xf32>
    %257 = vector.shape_cast %243 : vector<16x1xf32> to vector<16x1xf32>
    %258 = vector.broadcast %257 : vector<16x1xf32> to vector<16x16xf32>
    %259 = arith.select %206, %258, %256 : vector<16x16xi1>, vector<16x16xf32>
    %cst_67 = arith.constant 1.000000e-10 : f32
    %260 = vector.broadcast %cst_67 : f32 to vector<16x16xf32>
    %261 = arith.maximumf %259, %260 : vector<16x16xf32>
    %cst_68 = arith.constant dense<0.000000e+00> : vector<16xf32>
    %262 = vector.multi_reduction <add>, %261, %cst_68 [1] : vector<16x16xf32> to vector<16xf32>
    %263 = vector.shape_cast %262 : vector<16xf32> to vector<16x1xf32>
    %264 = vector.broadcast %263 : vector<16x1xf32> to vector<16x16xf32>
    %265 = arith.divf %261, %264 : vector<16x16xf32>
    %266 = math.log %265 : vector<16x16xf32>
    %c0_69 = arith.constant 0 : index
    %c0_70 = arith.constant 0 : index
    %267 = vector.load %arg2[%c0_69, %c0_70] : memref<16x16xf32, #tpu.memory_space<vmem>>, vector<16x16xf32>
    tpu.vector_store %arg2[%c0_69, %c0_70], %266 {strides = array<i32>} : memref<16x16xf32, #tpu.memory_space<vmem>>, vector<16x16xf32>,
    return
  }
}

</mosaic_0001>

<llo_original>
// kernel: rnn_lm_st_forward.1
$region0: #{rnn_lm_st_forward.1}
  #allocation0 [shape = 'u32[]', space=smem, size = 0x4, offset = 0x4, fixed_abs, tag = 'smem constant byte address 0x4 - core index']
  #allocation1 [shape = 'u32[144,128]{1,0:T(1,128)}', space=vmem, size = 0x12000, scoped, tag = 'internal scratch']
  %s0 = inlined_call_operand.hbm [shape: s32[2,8], index: 0, kind: input, shape index: {}]
  %s1 = inlined_call_operand.hbm [shape: f32[81,128], index: 1, kind: input, shape index: {}]
  %s2 = inlined_call_operand.vmem [shape: f32[16,16], index: 2, kind: output, shape index: {}]
  %s3 = sld [smem:[#allocation0]]
  $region26: #{rnn_lm_st_forward.1} parent=0
    _
  %s5 = ssub.s32 1, %s3
  %s6 = scalar_select 0, %s5, %s3
  $region1: #{rnn_lm_st_forward.1} parent=0
    #allocation2 [shape = 'u8[1024]{0}', space=smem, size = 0x400, scoped, tag = 'input window, operand 0, single buffered']
    #allocation3 [shape = 's32[1]{0}', space=sflag, size = 0x4, scoped, tag = 'scoped memory for rnn_lm_st_forward.1']
    #allocation4 [shape = 's32[1]{0}', space=sflag, size = 0x4, scoped, tag = 'scoped memory for rnn_lm_st_forward.1']
    #allocation5 [shape = 'u8[45056]{0}', space=vmem, size = 0xb000, scoped, tag = 'input window, operand 1, single buffered']
    %7 = vsyncpa [#allocation4], 0
    %8 = vsyncpa [#allocation3], 0
    // Predicated region
    $region2: #{rnn_lm_st_forward.1} parent=1 // pred_check
      _
    $region3: #{rnn_lm_st_forward.1} parent=1 // pred_check_branch
      %10 = sbr.rel (0) target = $region5
    $region4: #{rnn_lm_st_forward.1} parent=1 // pred_region
      %s12 = ssub.s32 32, 32
      %13 = vsyncadd [#allocation4], %s12
      %16 = dma.hbm_to_smem %s0, 32, [#allocation2], [#allocation4]
    $region5: #{rnn_lm_st_forward.1} parent=1 // pred_fallthru
      _
    // Predicated region
    $region6: #{rnn_lm_st_forward.1} parent=1 // pred_check
      _
    $region7: #{rnn_lm_st_forward.1} parent=1 // pred_check_branch
      %18 = sbr.rel (0) target = $region9
    $region8: #{rnn_lm_st_forward.1} parent=1 // pred_region
      %s20 = ssub.s32 1408, 1408
      %21 = vsyncadd [#allocation3], %s20
      %s22 = sshll.u32 [#allocation5], 4
      %s23 = int_to_ptr.vmem [resolvable:$true] %s22
      %28 = dma.hbm_to_vmem [thread:$0]  %s1, 1408, %s23, [#allocation3], 128, 128, 8
    $region9: #{rnn_lm_st_forward.1} parent=1 // pred_fallthru
      _
    // Predicated region
    $region10: #{rnn_lm_st_forward.1} parent=1 // pred_check
      _
    $region11: #{rnn_lm_st_forward.1} parent=1 // pred_check_branch
      %30 = sbr.rel (0) target = $region13
    $region12: #{rnn_lm_st_forward.1} parent=1 // pred_region
      %31 = dma.done [#allocation4], 32
    $region13: #{rnn_lm_st_forward.1} parent=1 // pred_fallthru
      _
    // Predicated region
    $region14: #{rnn_lm_st_forward.1} parent=1 // pred_check
      _
    $region15: #{rnn_lm_st_forward.1} parent=1 // pred_check_branch
      %33 = sbr.rel (0) target = $region17
    $region16: #{rnn_lm_st_forward.1} parent=1 // pred_region
      %34 = dma.done [#allocation3], 1408
    $region17: #{rnn_lm_st_forward.1} parent=1 // pred_fallthru
      _
    %35 = sfence
    %v36 = vld [vmem:[#allocation5 + $0x10] sm:$0xff]
    %v37 = vld [vmem:[#allocation5 + $0x18] sm:$0xff]
    %v38 = vld [vmem:[#allocation5 + $0x20] sm:$0xff]
    %v39 = vld [vmem:[#allocation5 + $0x28] sm:$0xff]
    %v40 = vld [vmem:[#allocation5 + $0x30] sm:$0xff]
    %v41 = vld [vmem:[#allocation5 + $0x38] sm:$0xff]
    %v42 = vld [vmem:[#allocation5 + $0x40] sm:$0xff]
    %v43 = vld [vmem:[#allocation5 + $0x48] sm:$0xff]
    %v44 = vld [vmem:[#allocation5 + $0x50] sm:$0x1]
    %s45 = sld [smem:[#allocation2]]
    %s46 = scalar_lea.vmem [#allocation5], %s45
    %v47 = vld [vmem:[%s46] sm:$0x1]
    %s48 = sld [smem:[#allocation2 + $0x80]]
    %s49 = scalar_lea.vmem [#allocation5], %s48
    %v50 = vld [vmem:[%s49] sm:$0x1]
    %v52 = vrot.slane %v50, 7
    %vm54 = vcmask 1040384
    %v55 = vsel %vm54, %v47, %v52
    %v56 = vxor.u32 %v55, 2147483648
    %v57 = vmul.f32 %v56, 1.442695
    %v58 = vpow.pop %v57
    %v59 = vadd.f32 %v58, 1.0
    %v60 = vrcp.pop %v59
    %v61 = vmul.f32 1.0, %v60
    %v62 = vtanh.pop %v55
    %64 = vrot.lane.b32.xlu0 %v62, 32
    %v65 = vpop.permute.xlu0 %64
    %v67 = vmul.f32 %v61, %v65
    %v68 = vtanh.pop %v67
    %70 = vrot.lane.b32.xlu0 %v68, 64
    %v71 = vpop.permute.xlu0 %70
    %v73 = vmul.f32 %v61, %v71
    %s74 = sld [smem:[#allocation2 + $0x1]]
    %s75 = scalar_lea.vmem [#allocation5], %s74
    %v76 = vld [vmem:[%s75] sm:$0x1]
    %s77 = sld [smem:[#allocation2 + $0x81]]
    %s78 = scalar_lea.vmem [#allocation5], %s77
    %v79 = vld [vmem:[%s78] sm:$0x1]
    %v81 = vrot.slane %v79, 7
    %v83 = vsel %vm54, %v76, %v81
    %85 = vrot.lane.b32.xlu0 %v73, 64
    %v86 = vpop.permute.xlu0 %85
    %vm87 = vcmask 261120
    %v88 = vsel %vm87, %v86, 0
    %90 = vmatprep.subr.mxu0 0.0
    %91 = vmatpush1.msra.mxu0 %v36
    %92 = vmatprep.subr.mxu0 0.0
    %93 = vmatpush1.msra.mxu0 %v37
    %94 = vmatprep.subr.mxu0 0.0
    %95 = vmatpush1.msra.mxu0 %v38
    %96 = vmatprep.subr.mxu0 0.0
    %97 = vmatpush1.msra.mxu0 %v39
    %98 = vmatprep.subr.mxu0 0.0
    %99 = vmatpush1.msra.mxu0 0.0
    %100 = vmatprep.subr.mxu0 0.0
    %101 = vmatpush1.msra.mxu0 0.0
    %102 = vmatprep.subr.mxu0 0.0
    %103 = vmatpush1.msra.mxu0 0.0
    %104 = vmatprep.subr.mxu0 0.0
    %105 = vmatpush1.msra.mxu0 0.0
    %106 = vmatprep.subr.mxu0 0.0
    %107 = vmatpush1.msra.mxu0 0.0
    %108 = vmatprep.subr.mxu0 0.0
    %109 = vmatpush1.msra.mxu0 0.0
    %110 = vmatprep.subr.mxu0 0.0
    %111 = vmatpush1.msra.mxu0 0.0
    %112 = vmatprep.subr.mxu0 0.0
    %113 = vmatpush1.msra.mxu0 0.0
    %114 = vmatprep.subr.mxu0 0.0
    %115 = vmatpush1.msra.mxu0 0.0
    %116 = vmatprep.subr.mxu0 0.0
    %117 = vmatpush1.msra.mxu0 0.0
    %118 = vmatprep.subr.mxu0 0.0
    %119 = vmatpush1.msra.mxu0 0.0
    %120 = vmatprep.subr.mxu0 0.0
    %121 = vmatpush1.msra.mxu0 0.0
    %122 = vmatprep.subr.mxu0 0.0
    %123 = vmatpush1.msra.mxu0 0.0
    %124 = vmatprep.subr.mxu0 0.0
    %125 = vmatpush1.msra.mxu0 0.0
    %126 = vmatprep.subr.mxu0 0.0
    %127 = vmatpush1.msra.mxu0 0.0
    %128 = vmatprep.subr.mxu0 0.0
    %129 = vmatpush1.msra.mxu0 0.0
    %130 = vmatprep.subr.mxu0 0.0
    %131 = vmatpush1.msra.mxu0 0.0
    %132 = vmatprep.subr.mxu0 0.0
    %133 = vmatpush1.msra.mxu0 0.0
    %134 = vmatprep.subr.mxu0 0.0
    %135 = vmatpush1.msra.mxu0 0.0
    %136 = vmatprep.subr.mxu0 0.0
    %137 = vmatpush1.msra.mxu0 0.0
    %138 = vmatprep.subr.mxu0 0.0
    %139 = vmatpush1.msra.mxu0 0.0
    %140 = vmatprep.subr.mxu0 0.0
    %141 = vmatpush1.msra.mxu0 0.0
    %142 = vmatprep.subr.mxu0 0.0
    %143 = vmatpush1.msra.mxu0 0.0
    %144 = vmatprep.subr.mxu0 0.0
    %145 = vmatpush1.msra.mxu0 0.0
    %146 = vmatprep.subr.mxu0 0.0
    %147 = vmatpush1.msra.mxu0 0.0
    %148 = vmatprep.subr.mxu0 0.0
    %149 = vmatpush1.msra.mxu0 0.0
    %150 = vmatprep.subr.mxu0 0.0
    %151 = vmatpush1.msra.mxu0 0.0
    %152 = vmatprep.subr.mxu0 0.0
    %153 = vmatpush1.msra.mxu0 0.0
    %154 = vmatprep.mubr.f32.mxu0 0.0
    %155 = vmatmul.mubr.f32.gmra.mrb[0].mxu0 %v88
    %v156 = vpop.f32.mrb[0].mxu0
    %v157 = vadd.f32 0.0, %v156
    %v158 = vpop.f32.mrb[0].mxu0
    %159 = vdwg.mxu0
    %v160 = vadd.f32 %v83, %v157
    %v161 = vxor.u32 %v160, 2147483648
    %v162 = vmul.f32 %v161, 1.442695
    %v163 = vpow.pop %v162
    %v164 = vadd.f32 %v163, 1.0
    %v165 = vrcp.pop %v164
    %v166 = vmul.f32 1.0, %v165
    %v167 = vtanh.pop %v160
    %169 = vrot.lane.b32.xlu0 %v67, 32
    %v170 = vpop.permute.xlu0 %169
    %v172 = vmul.f32 %v166, %v170
    %174 = vrot.lane.b32.xlu0 %v167, 32
    %v175 = vpop.permute.xlu0 %174
    %v177 = vmul.f32 %v166, %v175
    %179 = vrot.lane.b32.xlu0 %v177, 32
    %v180 = vpop.permute.xlu0 %179
    %v182 = vadd.f32 %v172, %v180
    %v183 = vtanh.pop %v182
    %185 = vrot.lane.b32.xlu0 %v183, 32
    %v186 = vpop.permute.xlu0 %185
    %v188 = vmul.f32 %v166, %v186
    %s189 = sld [smem:[#allocation2 + $0x2]]
    %s190 = scalar_lea.vmem [#allocation5], %s189
    %v191 = vld [vmem:[%s190] sm:$0x1]
    %s192 = sld [smem:[#allocation2 + $0x82]]
    %s193 = scalar_lea.vmem [#allocation5], %s192
    %v194 = vld [vmem:[%s193] sm:$0x1]
    %v196 = vrot.slane %v194, 7
    %v198 = vsel %vm54, %v191, %v196
    %200 = vrot.lane.b32.xlu0 %v188, 64
    %v201 = vpop.permute.xlu0 %200
    %v202 = vsel %vm87, %v201, 0
    %204 = vmatprep.subr.mxu0 0.0
    %205 = vmatpush1.msra.mxu0 %v36
    %206 = vmatprep.subr.mxu0 0.0
    %207 = vmatpush1.msra.mxu0 %v37
    %208 = vmatprep.subr.mxu0 0.0
    %209 = vmatpush1.msra.mxu0 %v38
    %210 = vmatprep.subr.mxu0 0.0
    %211 = vmatpush1.msra.mxu0 %v39
    %212 = vmatprep.subr.mxu0 0.0
    %213 = vmatpush1.msra.mxu0 0.0
    %214 = vmatprep.subr.mxu0 0.0
    %215 = vmatpush1.msra.mxu0 0.0
    %216 = vmatprep.subr.mxu0 0.0
    %217 = vmatpush1.msra.mxu0 0.0
    %218 = vmatprep.subr.mxu0 0.0
    %219 = vmatpush1.msra.mxu0 0.0
    %220 = vmatprep.subr.mxu0 0.0
    %221 = vmatpush1.msra.mxu0 0.0
    %222 = vmatprep.subr.mxu0 0.0
    %223 = vmatpush1.msra.mxu0 0.0
    %224 = vmatprep.subr.mxu0 0.0
    %225 = vmatpush1.msra.mxu0 0.0
    %226 = vmatprep.subr.mxu0 0.0
    %227 = vmatpush1.msra.mxu0 0.0
    %228 = vmatprep.subr.mxu0 0.0
    %229 = vmatpush1.msra.mxu0 0.0
    %230 = vmatprep.subr.mxu0 0.0
    %231 = vmatpush1.msra.mxu0 0.0
    %232 = vmatprep.subr.mxu0 0.0
    %233 = vmatpush1.msra.mxu0 0.0
    %234 = vmatprep.subr.mxu0 0.0
    %235 = vmatpush1.msra.mxu0 0.0
    %236 = vmatprep.subr.mxu0 0.0
    %237 = vmatpush1.msra.mxu0 0.0
    %238 = vmatprep.subr.mxu0 0.0
    %239 = vmatpush1.msra.mxu0 0.0
    %240 = vmatprep.subr.mxu0 0.0
    %241 = vmatpush1.msra.mxu0 0.0
    %242 = vmatprep.subr.mxu0 0.0
    %243 = vmatpush1.msra.mxu0 0.0
    %244 = vmatprep.subr.mxu0 0.0
    %245 = vmatpush1.msra.mxu0 0.0
    %246 = vmatprep.subr.mxu0 0.0
    %247 = vmatpush1.msra.mxu0 0.0
    %248 = vmatprep.subr.mxu0 0.0
    %249 = vmatpush1.msra.mxu0 0.0
    %250 = vmatprep.subr.mxu0 0.0
    %251 = vmatpush1.msra.mxu0 0.0
    %252 = vmatprep.subr.mxu0 0.0
    %253 = vmatpush1.msra.mxu0 0.0
    %254 = vmatprep.subr.mxu0 0.0
    %255 = vmatpush1.msra.mxu0 0.0
    %256 = vmatprep.subr.mxu0 0.0
    %257 = vmatpush1.msra.mxu0 0.0
    %258 = vmatprep.subr.mxu0 0.0
    %259 = vmatpush1.msra.mxu0 0.0
    %260 = vmatprep.subr.mxu0 0.0
    %261 = vmatpush1.msra.mxu0 0.0
    %262 = vmatprep.subr.mxu0 0.0
    %263 = vmatpush1.msra.mxu0 0.0
    %264 = vmatprep.subr.mxu0 0.0
    %265 = vmatpush1.msra.mxu0 0.0
    %266 = vmatprep.subr.mxu0 0.0
    %267 = vmatpush1.msra.mxu0 0.0
    %268 = vmatprep.mubr.f32.mxu0 0.0
    %269 = vmatmul.mubr.f32.gmra.mrb[0].mxu0 %v202
    %v270 = vpop.f32.mrb[0].mxu0
    %v271 = vadd.f32 0.0, %v270
    %v272 = vpop.f32.mrb[0].mxu0
    %273 = vdwg.mxu0
    %v274 = vadd.f32 %v198, %v271
    %v275 = vxor.u32 %v274, 2147483648
    %v276 = vmul.f32 %v275, 1.442695
    %v277 = vpow.pop %v276
    %v278 = vadd.f32 %v277, 1.0
    %v279 = vrcp.pop %v278
    %v280 = vmul.f32 1.0, %v279
    %v281 = vtanh.pop %v274
    %v282 = vmul.f32 %v280, %v182
    %284 = vrot.lane.b32.xlu0 %v281, 32
    %v285 = vpop.permute.xlu0 %284
    %v287 = vmul.f32 %v280, %v285
    %289 = vrot.lane.b32.xlu0 %v287, 32
    %v290 = vpop.permute.xlu0 %289
    %v292 = vadd.f32 %v282, %v290
    %v293 = vtanh.pop %v292
    %295 = vrot.lane.b32.xlu0 %v293, 32
    %v296 = vpop.permute.xlu0 %295
    %v298 = vmul.f32 %v280, %v296
    %s299 = sld [smem:[#allocation2 + $0x3]]
    %s300 = scalar_lea.vmem [#allocation5], %s299
    %v301 = vld [vmem:[%s300] sm:$0x1]
    %s302 = sld [smem:[#allocation2 + $0x83]]
    %s303 = scalar_lea.vmem [#allocation5], %s302
    %v304 = vld [vmem:[%s303] sm:$0x1]
    %v306 = vrot.slane %v304, 7
    %v308 = vsel %vm54, %v301, %v306
    %310 = vrot.lane.b32.xlu0 %v298, 64
    %v311 = vpop.permute.xlu0 %310
    %v312 = vsel %vm87, %v311, 0
    %314 = vmatprep.subr.mxu0 0.0
    %315 = vmatpush1.msra.mxu0 %v36
    %316 = vmatprep.subr.mxu0 0.0
    %317 = vmatpush1.msra.mxu0 %v37
    %318 = vmatprep.subr.mxu0 0.0
    %319 = vmatpush1.msra.mxu0 %v38
    %320 = vmatprep.subr.mxu0 0.0
    %321 = vmatpush1.msra.mxu0 %v39
    %322 = vmatprep.subr.mxu0 0.0
    %323 = vmatpush1.msra.mxu0 0.0
    %324 = vmatprep.subr.mxu0 0.0
    %325 = vmatpush1.msra.mxu0 0.0
    %326 = vmatprep.subr.mxu0 0.0
    %327 = vmatpush1.msra.mxu0 0.0
    %328 = vmatprep.subr.mxu0 0.0
    %329 = vmatpush1.msra.mxu0 0.0
    %330 = vmatprep.subr.mxu0 0.0
    %331 = vmatpush1.msra.mxu0 0.0
    %332 = vmatprep.subr.mxu0 0.0
    %333 = vmatpush1.msra.mxu0 0.0
    %334 = vmatprep.subr.mxu0 0.0
    %335 = vmatpush1.msra.mxu0 0.0
    %336 = vmatprep.subr.mxu0 0.0
    %337 = vmatpush1.msra.mxu0 0.0
    %338 = vmatprep.subr.mxu0 0.0
    %339 = vmatpush1.msra.mxu0 0.0
    %340 = vmatprep.subr.mxu0 0.0
    %341 = vmatpush1.msra.mxu0 0.0
    %342 = vmatprep.subr.mxu0 0.0
    %343 = vmatpush1.msra.mxu0 0.0
    %344 = vmatprep.subr.mxu0 0.0
    %345 = vmatpush1.msra.mxu0 0.0
    %346 = vmatprep.subr.mxu0 0.0
    %347 = vmatpush1.msra.mxu0 0.0
    %348 = vmatprep.subr.mxu0 0.0
    %349 = vmatpush1.msra.mxu0 0.0
    %350 = vmatprep.subr.mxu0 0.0
    %351 = vmatpush1.msra.mxu0 0.0
    %352 = vmatprep.subr.mxu0 0.0
    %353 = vmatpush1.msra.mxu0 0.0
    %354 = vmatprep.subr.mxu0 0.0
    %355 = vmatpush1.msra.mxu0 0.0
    %356 = vmatprep.subr.mxu0 0.0
    %357 = vmatpush1.msra.mxu0 0.0
    %358 = vmatprep.subr.mxu0 0.0
    %359 = vmatpush1.msra.mxu0 0.0
    %360 = vmatprep.subr.mxu0 0.0
    %361 = vmatpush1.msra.mxu0 0.0
    %362 = vmatprep.subr.mxu0 0.0
    %363 = vmatpush1.msra.mxu0 0.0
    %364 = vmatprep.subr.mxu0 0.0
    %365 = vmatpush1.msra.mxu0 0.0
    %366 = vmatprep.subr.mxu0 0.0
    %367 = vmatpush1.msra.mxu0 0.0
    %368 = vmatprep.subr.mxu0 0.0
    %369 = vmatpush1.msra.mxu0 0.0
    %370 = vmatprep.subr.mxu0 0.0
    %371 = vmatpush1.msra.mxu0 0.0
    %372 = vmatprep.subr.mxu0 0.0
    %373 = vmatpush1.msra.mxu0 0.0
    %374 = vmatprep.subr.mxu0 0.0
    %375 = vmatpush1.msra.mxu0 0.0
    %376 = vmatprep.subr.mxu0 0.0
    %377 = vmatpush1.msra.mxu0 0.0
    %378 = vmatprep.mubr.f32.mxu0 0.0
    %379 = vmatmul.mubr.f32.gmra.mrb[0].mxu0 %v312
    %v380 = vpop.f32.mrb[0].mxu0
    %v381 = vadd.f32 0.0, %v380
    %v382 = vpop.f32.mrb[0].mxu0
    %383 = vdwg.mxu0
    %v384 = vadd.f32 %v308, %v381
    %v385 = vxor.u32 %v384, 2147483648
    %v386 = vmul.f32 %v385, 1.442695
    %v387 = vpow.pop %v386
    %v388 = vadd.f32 %v387, 1.0
    %v389 = vrcp.pop %v388
    %v390 = vmul.f32 1.0, %v389
    %v391 = vtanh.pop %v384
    %v392 = vmul.f32 %v390, %v292
    %394 = vrot.lane.b32.xlu0 %v391, 32
    %v395 = vpop.permute.xlu0 %394
    %v397 = vmul.f32 %v390, %v395
    %399 = vrot.lane.b32.xlu0 %v397, 32
    %v400 = vpop.permute.xlu0 %399
    %v402 = vadd.f32 %v392, %v400
    %v403 = vtanh.pop %v402
    %405 = vrot.lane.b32.xlu0 %v403, 32
    %v406 = vpop.permute.xlu0 %405
    %v408 = vmul.f32 %v390, %v406
    %s409 = sld [smem:[#allocation2 + $0x4]]
    %s410 = scalar_lea.vmem [#allocation5], %s409
    %v411 = vld [vmem:[%s410] sm:$0x1]
    %s412 = sld [smem:[#allocation2 + $0x84]]
    %s413 = scalar_lea.vmem [#allocation5], %s412
    %v414 = vld [vmem:[%s413] sm:$0x1]
    %v416 = vrot.slane %v414, 7
    %v418 = vsel %vm54, %v411, %v416
    %420 = vrot.lane.b32.xlu0 %v408, 64
    %v421 = vpop.permute.xlu0 %420
    %v422 = vsel %vm87, %v421, 0
    %424 = vmatprep.subr.mxu0 0.0
    %425 = vmatpush1.msra.mxu0 %v36
    %426 = vmatprep.subr.mxu0 0.0
    %427 = vmatpush1.msra.mxu0 %v37
    %428 = vmatprep.subr.mxu0 0.0
    %429 = vmatpush1.msra.mxu0 %v38
    %430 = vmatprep.subr.mxu0 0.0
    %431 = vmatpush1.msra.mxu0 %v39
    %432 = vmatprep.subr.mxu0 0.0
    %433 = vmatpush1.msra.mxu0 0.0
    %434 = vmatprep.subr.mxu0 0.0
    %435 = vmatpush1.msra.mxu0 0.0
    %436 = vmatprep.subr.mxu0 0.0
    %437 = vmatpush1.msra.mxu0 0.0
    %438 = vmatprep.subr.mxu0 0.0
    %439 = vmatpush1.msra.mxu0 0.0
    %440 = vmatprep.subr.mxu0 0.0
    %441 = vmatpush1.msra.mxu0 0.0
    %442 = vmatprep.subr.mxu0 0.0
    %443 = vmatpush1.msra.mxu0 0.0
    %444 = vmatprep.subr.mxu0 0.0
    %445 = vmatpush1.msra.mxu0 0.0
    %446 = vmatprep.subr.mxu0 0.0
    %447 = vmatpush1.msra.mxu0 0.0
    %448 = vmatprep.subr.mxu0 0.0
    %449 = vmatpush1.msra.mxu0 0.0
    %450 = vmatprep.subr.mxu0 0.0
    %451 = vmatpush1.msra.mxu0 0.0
    %452 = vmatprep.subr.mxu0 0.0
    %453 = vmatpush1.msra.mxu0 0.0
    %454 = vmatprep.subr.mxu0 0.0
    %455 = vmatpush1.msra.mxu0 0.0
    %456 = vmatprep.subr.mxu0 0.0
    %457 = vmatpush1.msra.mxu0 0.0
    %458 = vmatprep.subr.mxu0 0.0
    %459 = vmatpush1.msra.mxu0 0.0
    %460 = vmatprep.subr.mxu0 0.0
    %461 = vmatpush1.msra.mxu0 0.0
    %462 = vmatprep.subr.mxu0 0.0
    %463 = vmatpush1.msra.mxu0 0.0
    %464 = vmatprep.subr.mxu0 0.0
    %465 = vmatpush1.msra.mxu0 0.0
    %466 = vmatprep.subr.mxu0 0.0
    %467 = vmatpush1.msra.mxu0 0.0
    %468 = vmatprep.subr.mxu0 0.0
    %469 = vmatpush1.msra.mxu0 0.0
    %470 = vmatprep.subr.mxu0 0.0
    %471 = vmatpush1.msra.mxu0 0.0
    %472 = vmatprep.subr.mxu0 0.0
    %473 = vmatpush1.msra.mxu0 0.0
    %474 = vmatprep.subr.mxu0 0.0
    %475 = vmatpush1.msra.mxu0 0.0
    %476 = vmatprep.subr.mxu0 0.0
    %477 = vmatpush1.msra.mxu0 0.0
    %478 = vmatprep.subr.mxu0 0.0
    %479 = vmatpush1.msra.mxu0 0.0
    %480 = vmatprep.subr.mxu0 0.0
    %481 = vmatpush1.msra.mxu0 0.0
    %482 = vmatprep.subr.mxu0 0.0
    %483 = vmatpush1.msra.mxu0 0.0
    %484 = vmatprep.subr.mxu0 0.0
    %485 = vmatpush1.msra.mxu0 0.0
    %486 = vmatprep.subr.mxu0 0.0
    %487 = vmatpush1.msra.mxu0 0.0
    %488 = vmatprep.mubr.f32.mxu0 0.0
    %489 = vmatmul.mubr.f32.gmra.mrb[0].mxu0 %v422
    %v490 = vpop.f32.mrb[0].mxu0
    %v491 = vadd.f32 0.0, %v490
    %v492 = vpop.f32.mrb[0].mxu0
    %493 = vdwg.mxu0
    %v494 = vadd.f32 %v418, %v491
    %v495 = vxor.u32 %v494, 2147483648
    %v496 = vmul.f32 %v495, 1.442695
    %v497 = vpow.pop %v496
    %v498 = vadd.f32 %v497, 1.0
    %v499 = vrcp.pop %v498
    %v500 = vmul.f32 1.0, %v499
    %v501 = vtanh.pop %v494
    %v502 = vmul.f32 %v500, %v402
    %504 = vrot.lane.b32.xlu0 %v501, 32
    %v505 = vpop.permute.xlu0 %504
    %v507 = vmul.f32 %v500, %v505
    %509 = vrot.lane.b32.xlu0 %v507, 32
    %v510 = vpop.permute.xlu0 %509
    %v512 = vadd.f32 %v502, %v510
    %v513 = vtanh.pop %v512
    %515 = vrot.lane.b32.xlu0 %v513, 32
    %v516 = vpop.permute.xlu0 %515
    %v518 = vmul.f32 %v500, %v516
    %s519 = sld [smem:[#allocation2 + $0x5]]
    %s520 = scalar_lea.vmem [#allocation5], %s519
    %v521 = vld [vmem:[%s520] sm:$0x1]
    %s522 = sld [smem:[#allocation2 + $0x85]]
    %s523 = scalar_lea.vmem [#allocation5], %s522
    %v524 = vld [vmem:[%s523] sm:$0x1]
    %v526 = vrot.slane %v524, 7
    %v528 = vsel %vm54, %v521, %v526
    %530 = vrot.lane.b32.xlu0 %v518, 64
    %v531 = vpop.permute.xlu0 %530
    %v532 = vsel %vm87, %v531, 0
    %534 = vmatprep.subr.mxu0 0.0
    %535 = vmatpush1.msra.mxu0 %v36
    %536 = vmatprep.subr.mxu0 0.0
    %537 = vmatpush1.msra.mxu0 %v37
    %538 = vmatprep.subr.mxu0 0.0
    %539 = vmatpush1.msra.mxu0 %v38
    %540 = vmatprep.subr.mxu0 0.0
    %541 = vmatpush1.msra.mxu0 %v39
    %542 = vmatprep.subr.mxu0 0.0
    %543 = vmatpush1.msra.mxu0 0.0
    %544 = vmatprep.subr.mxu0 0.0
    %545 = vmatpush1.msra.mxu0 0.0
    %546 = vmatprep.subr.mxu0 0.0
    %547 = vmatpush1.msra.mxu0 0.0
    %548 = vmatprep.subr.mxu0 0.0
    %549 = vmatpush1.msra.mxu0 0.0
    %550 = vmatprep.subr.mxu0 0.0
    %551 = vmatpush1.msra.mxu0 0.0
    %552 = vmatprep.subr.mxu0 0.0
    %553 = vmatpush1.msra.mxu0 0.0
    %554 = vmatprep.subr.mxu0 0.0
    %555 = vmatpush1.msra.mxu0 0.0
    %556 = vmatprep.subr.mxu0 0.0
    %557 = vmatpush1.msra.mxu0 0.0
    %558 = vmatprep.subr.mxu0 0.0
    %559 = vmatpush1.msra.mxu0 0.0
    %560 = vmatprep.subr.mxu0 0.0
    %561 = vmatpush1.msra.mxu0 0.0
    %562 = vmatprep.subr.mxu0 0.0
    %563 = vmatpush1.msra.mxu0 0.0
    %564 = vmatprep.subr.mxu0 0.0
    %565 = vmatpush1.msra.mxu0 0.0
    %566 = vmatprep.subr.mxu0 0.0
    %567 = vmatpush1.msra.mxu0 0.0
    %568 = vmatprep.subr.mxu0 0.0
    %569 = vmatpush1.msra.mxu0 0.0
    %570 = vmatprep.subr.mxu0 0.0
    %571 = vmatpush1.msra.mxu0 0.0
    %572 = vmatprep.subr.mxu0 0.0
    %573 = vmatpush1.msra.mxu0 0.0
    %574 = vmatprep.subr.mxu0 0.0
    %575 = vmatpush1.msra.mxu0 0.0
    %576 = vmatprep.subr.mxu0 0.0
    %577 = vmatpush1.msra.mxu0 0.0
    %578 = vmatprep.subr.mxu0 0.0
    %579 = vmatpush1.msra.mxu0 0.0
    %580 = vmatprep.subr.mxu0 0.0
    %581 = vmatpush1.msra.mxu0 0.0
    %582 = vmatprep.subr.mxu0 0.0
    %583 = vmatpush1.msra.mxu0 0.0
    %584 = vmatprep.subr.mxu0 0.0
    %585 = vmatpush1.msra.mxu0 0.0
    %586 = vmatprep.subr.mxu0 0.0
    %587 = vmatpush1.msra.mxu0 0.0
    %588 = vmatprep.subr.mxu0 0.0
    %589 = vmatpush1.msra.mxu0 0.0
    %590 = vmatprep.subr.mxu0 0.0
    %591 = vmatpush1.msra.mxu0 0.0
    %592 = vmatprep.subr.mxu0 0.0
    %593 = vmatpush1.msra.mxu0 0.0
    %594 = vmatprep.subr.mxu0 0.0
    %595 = vmatpush1.msra.mxu0 0.0
    %596 = vmatprep.subr.mxu0 0.0
    %597 = vmatpush1.msra.mxu0 0.0
    %598 = vmatprep.mubr.f32.mxu0 0.0
    %599 = vmatmul.mubr.f32.gmra.mrb[0].mxu0 %v532
    %v600 = vpop.f32.mrb[0].mxu0
    %v601 = vadd.f32 0.0, %v600
    %v602 = vpop.f32.mrb[0].mxu0
    %603 = vdwg.mxu0
    %v604 = vadd.f32 %v528, %v601
    %v605 = vxor.u32 %v604, 2147483648
    %v606 = vmul.f32 %v605, 1.442695
    %v607 = vpow.pop %v606
    %v608 = vadd.f32 %v607, 1.0
    %v609 = vrcp.pop %v608
    %v610 = vmul.f32 1.0, %v609
    %v611 = vtanh.pop %v604
    %v612 = vmul.f32 %v610, %v512
    %614 = vrot.lane.b32.xlu0 %v611, 32
    %v615 = vpop.permute.xlu0 %614
    %v617 = vmul.f32 %v610, %v615
    %619 = vrot.lane.b32.xlu0 %v617, 32
    %v620 = vpop.permute.xlu0 %619
    %v622 = vadd.f32 %v612, %v620
    %v623 = vtanh.pop %v622
    %625 = vrot.lane.b32.xlu0 %v623, 32
    %v626 = vpop.permute.xlu0 %625
    %v628 = vmul.f32 %v610, %v626
    %s629 = sld [smem:[#allocation2 + $0x6]]
    %s630 = scalar_lea.vmem [#allocation5], %s629
    %v631 = vld [vmem:[%s630] sm:$0x1]
    %s632 = sld [smem:[#allocation2 + $0x86]]
    %s633 = scalar_lea.vmem [#allocation5], %s632
    %v634 = vld [vmem:[%s633] sm:$0x1]
    %v636 = vrot.slane %v634, 7
    %v638 = vsel %vm54, %v631, %v636
    %640 = vrot.lane.b32.xlu0 %v628, 64
    %v641 = vpop.permute.xlu0 %640
    %v642 = vsel %vm87, %v641, 0
    %644 = vmatprep.subr.mxu0 0.0
    %645 = vmatpush1.msra.mxu0 %v36
    %646 = vmatprep.subr.mxu0 0.0
    %647 = vmatpush1.msra.mxu0 %v37
    %648 = vmatprep.subr.mxu0 0.0
    %649 = vmatpush1.msra.mxu0 %v38
    %650 = vmatprep.subr.mxu0 0.0
    %651 = vmatpush1.msra.mxu0 %v39
    %652 = vmatprep.subr.mxu0 0.0
    %653 = vmatpush1.msra.mxu0 0.0
    %654 = vmatprep.subr.mxu0 0.0
    %655 = vmatpush1.msra.mxu0 0.0
    %656 = vmatprep.subr.mxu0 0.0
    %657 = vmatpush1.msra.mxu0 0.0
    %658 = vmatprep.subr.mxu0 0.0
    %659 = vmatpush1.msra.mxu0 0.0
    %660 = vmatprep.subr.mxu0 0.0
    %661 = vmatpush1.msra.mxu0 0.0
    %662 = vmatprep.subr.mxu0 0.0
    %663 = vmatpush1.msra.mxu0 0.0
    %664 = vmatprep.subr.mxu0 0.0
    %665 = vmatpush1.msra.mxu0 0.0
    %666 = vmatprep.subr.mxu0 0.0
    %667 = vmatpush1.msra.mxu0 0.0
    %668 = vmatprep.subr.mxu0 0.0
    %669 = vmatpush1.msra.mxu0 0.0
    %670 = vmatprep.subr.mxu0 0.0
    %671 = vmatpush1.msra.mxu0 0.0
    %672 = vmatprep.subr.mxu0 0.0
    %673 = vmatpush1.msra.mxu0 0.0
    %674 = vmatprep.subr.mxu0 0.0
    %675 = vmatpush1.msra.mxu0 0.0
    %676 = vmatprep.subr.mxu0 0.0
    %677 = vmatpush1.msra.mxu0 0.0
    %678 = vmatprep.subr.mxu0 0.0
    %679 = vmatpush1.msra.mxu0 0.0
    %680 = vmatprep.subr.mxu0 0.0
    %681 = vmatpush1.msra.mxu0 0.0
    %682 = vmatprep.subr.mxu0 0.0
    %683 = vmatpush1.msra.mxu0 0.0
    %684 = vmatprep.subr.mxu0 0.0
    %685 = vmatpush1.msra.mxu0 0.0
    %686 = vmatprep.subr.mxu0 0.0
    %687 = vmatpush1.msra.mxu0 0.0
    %688 = vmatprep.subr.mxu0 0.0
    %689 = vmatpush1.msra.mxu0 0.0
    %690 = vmatprep.subr.mxu0 0.0
    %691 = vmatpush1.msra.mxu0 0.0
    %692 = vmatprep.subr.mxu0 0.0
    %693 = vmatpush1.msra.mxu0 0.0
    %694 = vmatprep.subr.mxu0 0.0
    %695 = vmatpush1.msra.mxu0 0.0
    %696 = vmatprep.subr.mxu0 0.0
    %697 = vmatpush1.msra.mxu0 0.0
    %698 = vmatprep.subr.mxu0 0.0
    %699 = vmatpush1.msra.mxu0 0.0
    %700 = vmatprep.subr.mxu0 0.0
    %701 = vmatpush1.msra.mxu0 0.0
    %702 = vmatprep.subr.mxu0 0.0
    %703 = vmatpush1.msra.mxu0 0.0
    %704 = vmatprep.subr.mxu0 0.0
    %705 = vmatpush1.msra.mxu0 0.0
    %706 = vmatprep.subr.mxu0 0.0
    %707 = vmatpush1.msra.mxu0 0.0
    %708 = vmatprep.mubr.f32.mxu0 0.0
    %709 = vmatmul.mubr.f32.gmra.mrb[0].mxu0 %v642
    %v710 = vpop.f32.mrb[0].mxu0
    %v711 = vadd.f32 0.0, %v710
    %v712 = vpop.f32.mrb[0].mxu0
    %713 = vdwg.mxu0
    %v714 = vadd.f32 %v638, %v711
    %v715 = vxor.u32 %v714, 2147483648
    %v716 = vmul.f32 %v715, 1.442695
    %v717 = vpow.pop %v716
    %v718 = vadd.f32 %v717, 1.0
    %v719 = vrcp.pop %v718
    %v720 = vmul.f32 1.0, %v719
    %v721 = vtanh.pop %v714
    %v722 = vmul.f32 %v720, %v622
    %724 = vrot.lane.b32.xlu0 %v721, 32
    %v725 = vpop.permute.xlu0 %724
    %v727 = vmul.f32 %v720, %v725
    %729 = vrot.lane.b32.xlu0 %v727, 32
    %v730 = vpop.permute.xlu0 %729
    %v732 = vadd.f32 %v722, %v730
    %v733 = vtanh.pop %v732
    %735 = vrot.lane.b32.xlu0 %v733, 32
    %v736 = vpop.permute.xlu0 %735
    %v738 = vmul.f32 %v720, %v736
    %s739 = sld [smem:[#allocation2 + $0x7]]
    %s740 = scalar_lea.vmem [#allocation5], %s739
    %v741 = vld [vmem:[%s740] sm:$0x1]
    %s742 = sld [smem:[#allocation2 + $0x87]]
    %s743 = scalar_lea.vmem [#allocation5], %s742
    %v744 = vld [vmem:[%s743] sm:$0x1]
    %v746 = vrot.slane %v744, 7
    %v748 = vsel %vm54, %v741, %v746
    %750 = vrot.lane.b32.xlu0 %v738, 64
    %v751 = vpop.permute.xlu0 %750
    %v752 = vsel %vm87, %v751, 0
    %754 = vmatprep.subr.mxu0 0.0
    %755 = vmatpush1.msra.mxu0 %v36
    %756 = vmatprep.subr.mxu0 0.0
    %757 = vmatpush1.msra.mxu0 %v37
    %758 = vmatprep.subr.mxu0 0.0
    %759 = vmatpush1.msra.mxu0 %v38
    %760 = vmatprep.subr.mxu0 0.0
    %761 = vmatpush1.msra.mxu0 %v39
    %762 = vmatprep.subr.mxu0 0.0
    %763 = vmatpush1.msra.mxu0 0.0
    %764 = vmatprep.subr.mxu0 0.0
    %765 = vmatpush1.msra.mxu0 0.0
    %766 = vmatprep.subr.mxu0 0.0
    %767 = vmatpush1.msra.mxu0 0.0
    %768 = vmatprep.subr.mxu0 0.0
    %769 = vmatpush1.msra.mxu0 0.0
    %770 = vmatprep.subr.mxu0 0.0
    %771 = vmatpush1.msra.mxu0 0.0
    %772 = vmatprep.subr.mxu0 0.0
    %773 = vmatpush1.msra.mxu0 0.0
    %774 = vmatprep.subr.mxu0 0.0
    %775 = vmatpush1.msra.mxu0 0.0
    %776 = vmatprep.subr.mxu0 0.0
    %777 = vmatpush1.msra.mxu0 0.0
    %778 = vmatprep.subr.mxu0 0.0
    %779 = vmatpush1.msra.mxu0 0.0
    %780 = vmatprep.subr.mxu0 0.0
    %781 = vmatpush1.msra.mxu0 0.0
    %782 = vmatprep.subr.mxu0 0.0
    %783 = vmatpush1.msra.mxu0 0.0
    %784 = vmatprep.subr.mxu0 0.0
    %785 = vmatpush1.msra.mxu0 0.0
    %786 = vmatprep.subr.mxu0 0.0
    %787 = vmatpush1.msra.mxu0 0.0
    %788 = vmatprep.subr.mxu0 0.0
    %789 = vmatpush1.msra.mxu0 0.0
    %790 = vmatprep.subr.mxu0 0.0
    %791 = vmatpush1.msra.mxu0 0.0
    %792 = vmatprep.subr.mxu0 0.0
    %793 = vmatpush1.msra.mxu0 0.0
    %794 = vmatprep.subr.mxu0 0.0
    %795 = vmatpush1.msra.mxu0 0.0
    %796 = vmatprep.subr.mxu0 0.0
    %797 = vmatpush1.msra.mxu0 0.0
    %798 = vmatprep.subr.mxu0 0.0
    %799 = vmatpush1.msra.mxu0 0.0
    %800 = vmatprep.subr.mxu0 0.0
    %801 = vmatpush1.msra.mxu0 0.0
    %802 = vmatprep.subr.mxu0 0.0
    %803 = vmatpush1.msra.mxu0 0.0
    %804 = vmatprep.subr.mxu0 0.0
    %805 = vmatpush1.msra.mxu0 0.0
    %806 = vmatprep.subr.mxu0 0.0
    %807 = vmatpush1.msra.mxu0 0.0
    %808 = vmatprep.subr.mxu0 0.0
    %809 = vmatpush1.msra.mxu0 0.0
    %810 = vmatprep.subr.mxu0 0.0
    %811 = vmatpush1.msra.mxu0 0.0
    %812 = vmatprep.subr.mxu0 0.0
    %813 = vmatpush1.msra.mxu0 0.0
    %814 = vmatprep.subr.mxu0 0.0
    %815 = vmatpush1.msra.mxu0 0.0
    %816 = vmatprep.subr.mxu0 0.0
    %817 = vmatpush1.msra.mxu0 0.0
    %818 = vmatprep.mubr.f32.mxu0 0.0
    %819 = vmatmul.mubr.f32.gmra.mrb[0].mxu0 %v752
    %v820 = vpop.f32.mrb[0].mxu0
    %v821 = vadd.f32 0.0, %v820
    %v822 = vpop.f32.mrb[0].mxu0
    %823 = vdwg.mxu0
    %v824 = vadd.f32 %v748, %v821
    %v825 = vxor.u32 %v824, 2147483648
    %v826 = vmul.f32 %v825, 1.442695
    %v827 = vpow.pop %v826
    %v828 = vadd.f32 %v827, 1.0
    %v829 = vrcp.pop %v828
    %v830 = vmul.f32 1.0, %v829
    %v831 = vtanh.pop %v824
    %v832 = vmul.f32 %v830, %v732
    %834 = vrot.lane.b32.xlu0 %v831, 32
    %v835 = vpop.permute.xlu0 %834
    %v837 = vmul.f32 %v830, %v835
    %839 = vrot.lane.b32.xlu0 %v837, 32
    %v840 = vpop.permute.xlu0 %839
    %v842 = vadd.f32 %v832, %v840
    %v843 = vtanh.pop %v842
    %845 = vrot.lane.b32.xlu0 %v843, 32
    %v846 = vpop.permute.xlu0 %845
    %v848 = vmul.f32 %v830, %v846
    %v849 = vrot.slane %v188, 6
    %v851 = vrot.slane %v298, 4
    %v853 = vrot.slane %v408, 2
    %v855 = vrot.slane %v628, 6
    %v857 = vrot.slane %v738, 4
    %v860 = vrot.slane %v848, 2
    %vm862 = vcmask 1041408
    %v863 = vsel %vm862, %v73, %v849
    %vm864 = vcmask 1043456
    %v865 = vsel %vm864, %v863, %v851
    %vm866 = vcmask 1045504
    %v867 = vsel %vm866, %v865, %v853
    %v868 = vsel %vm862, %v518, %v855
    %v869 = vsel %vm864, %v868, %v857
    %v870 = vsel %vm866, %v869, %v860
    %v871 = vlaneseq
    %v872 = vshrl.u32 %v871, 7
    %v873 = vsub.s32 0, %v872
    %v874 = vrot.slane %v44, %v873
    %877 = vrot.lane.b32.xlu0 %v867, 64
    %v878 = vpop.permute.xlu0 %877
    %879 = vrot.lane.b32.xlu0 %v870, 64
    %v880 = vpop.permute.xlu0 %879
    %v881 = vsel %vm87, %v878, 0
    %v883 = vsel %vm87, %v880, 0
    %885 = vmatprep.subr.mxu0 0.0
    %886 = vmatpush1.msra.mxu0 %v40
    %887 = vmatprep.subr.mxu0 0.0
    %888 = vmatpush1.msra.mxu0 %v41
    %889 = vmatprep.subr.mxu0 0.0
    %890 = vmatpush1.msra.mxu0 %v42
    %891 = vmatprep.subr.mxu0 0.0
    %892 = vmatpush1.msra.mxu0 %v43
    %893 = vmatprep.subr.mxu0 0.0
    %894 = vmatpush1.msra.mxu0 0.0
    %895 = vmatprep.subr.mxu0 0.0
    %896 = vmatpush1.msra.mxu0 0.0
    %897 = vmatprep.subr.mxu0 0.0
    %898 = vmatpush1.msra.mxu0 0.0
    %899 = vmatprep.subr.mxu0 0.0
    %900 = vmatpush1.msra.mxu0 0.0
    %901 = vmatprep.subr.mxu0 0.0
    %902 = vmatpush1.msra.mxu0 0.0
    %903 = vmatprep.subr.mxu0 0.0
    %904 = vmatpush1.msra.mxu0 0.0
    %905 = vmatprep.subr.mxu0 0.0
    %906 = vmatpush1.msra.mxu0 0.0
    %907 = vmatprep.subr.mxu0 0.0
    %908 = vmatpush1.msra.mxu0 0.0
    %909 = vmatprep.subr.mxu0 0.0
    %910 = vmatpush1.msra.mxu0 0.0
    %911 = vmatprep.subr.mxu0 0.0
    %912 = vmatpush1.msra.mxu0 0.0
    %913 = vmatprep.subr.mxu0 0.0
    %914 = vmatpush1.msra.mxu0 0.0
    %915 = vmatprep.subr.mxu0 0.0
    %916 = vmatpush1.msra.mxu0 0.0
    %917 = vmatprep.subr.mxu0 0.0
    %918 = vmatpush1.msra.mxu0 0.0
    %919 = vmatprep.subr.mxu0 0.0
    %920 = vmatpush1.msra.mxu0 0.0
    %921 = vmatprep.subr.mxu0 0.0
    %922 = vmatpush1.msra.mxu0 0.0
    %923 = vmatprep.subr.mxu0 0.0
    %924 = vmatpush1.msra.mxu0 0.0
    %925 = vmatprep.subr.mxu0 0.0
    %926 = vmatpush1.msra.mxu0 0.0
    %927 = vmatprep.subr.mxu0 0.0
    %928 = vmatpush1.msra.mxu0 0.0
    %929 = vmatprep.subr.mxu0 0.0
    %930 = vmatpush1.msra.mxu0 0.0
    %931 = vmatprep.subr.mxu0 0.0
    %932 = vmatpush1.msra.mxu0 0.0
    %933 = vmatprep.subr.mxu0 0.0
    %934 = vmatpush1.msra.mxu0 0.0
    %935 = vmatprep.subr.mxu0 0.0
    %936 = vmatpush1.msra.mxu0 0.0
    %937 = vmatprep.subr.mxu0 0.0
    %938 = vmatpush1.msra.mxu0 0.0
    %939 = vmatprep.subr.mxu0 0.0
    %940 = vmatpush1.msra.mxu0 0.0
    %941 = vmatprep.subr.mxu0 0.0
    %942 = vmatpush1.msra.mxu0 0.0
    %943 = vmatprep.subr.mxu0 0.0
    %944 = vmatpush1.msra.mxu0 0.0
    %945 = vmatprep.subr.mxu0 0.0
    %946 = vmatpush1.msra.mxu0 0.0
    %947 = vmatprep.subr.mxu0 0.0
    %948 = vmatpush1.msra.mxu0 0.0
    %949 = vmatprep.mubr.f32.mxu0 0.0
    %950 = vmatmul.mubr.f32.gmra.mrb[0].mxu0 %v881
    %v951 = vpop.f32.mrb[0].mxu0
    %v952 = vadd.f32 %v874, %v951
    %v953 = vpop.f32.mrb[0].mxu0
    %954 = vmatprep.mubr.f32.mxu0 0.0
    %955 = vmatmul.mubr.f32.gmra.mrb[0].mxu0 %v883
    %v956 = vpop.f32.mrb[0].mxu0
    %v957 = vadd.f32 %v874, %v956
    %v958 = vpop.f32.mrb[0].mxu0
    %959 = vdwg.mxu0
    %v960 = vlaneseq
    %v961 = vand.u32 %v960, 127
    %vm962 = vcmp.eq.s32.totalorder %v961, 15
    %v963 = vlaneseq
    %v964 = vshrl.u32 %v963, 7
    %v965 = vadd.s32 %v964, 8
    %v966 = vxor.u32 %v952, 2147483648
    %v967 = vxor.u32 %v957, 2147483648
    %v968 = vmul.f32 %v966, 1.442695
    %v969 = vpow.pop %v968
    %v970 = vmul.f32 %v967, 1.442695
    %v971 = vpow.pop %v970
    %v972 = vadd.f32 %v969, 1.0
    %v973 = vadd.f32 %v971, 1.0
    %v974 = vrcp.pop %v972
    %v975 = vmul.f32 1.0, %v974
    %v976 = vrcp.pop %v973
    %v977 = vmul.f32 1.0, %v976
    %v978 = vmul.f32 %v975, 0.99
    %v979 = vmul.f32 %v977, 0.99
    %v980 = vmax.f32 %v978, 1e-10
    %v981 = vmax.f32 %v979, 1e-10
    %vm982 = vcmp.lt.s32.totalorder %v964, 4
    %vm983 = vcmp.lt.s32.totalorder %v965, 4
    %v984 = vlog2.pop %v980
    %v985 = vmul.f32 %v984, 0.6931472
    %v986 = vlog2.pop %v981
    %v987 = vmul.f32 %v986, 0.6931472
    %v988 = vsel %vm982, 0.0, %v985
    %v989 = vsel %vm983, 0.0, %v987
    %v990 = vadd.f32 %v988, 0.0
    %v992 = vrot.slane %v988, 2
    %v994 = vadd.f32 %v990, %v992
    %v995 = vrot.slane %v988, 4
    %v997 = vadd.f32 %v994, %v995
    %v998 = vrot.slane %v988, 6
    %v1000 = vadd.f32 %v997, %v998
    %v1001 = vadd.f32 %v1000, %v989
    %v1003 = vrot.slane %v989, 2
    %v1005 = vadd.f32 %v1001, %v1003
    %v1006 = vrot.slane %v989, 4
    %v1008 = vadd.f32 %v1005, %v1006
    %v1009 = vrot.slane %v989, 6
    %v1011 = vadd.f32 %v1008, %v1009
    %v1013 = vrot.slane %v994, 6
    %v1016 = vrot.slane %v997, 4
    %v1019 = vrot.slane %v1000, 2
    %v1022 = vrot.slane %v1005, 6
    %v1025 = vrot.slane %v1008, 4
    %v1028 = vrot.slane %v1011, 2
    %v1030 = vsel %vm862, %v990, %v1013
    %v1031 = vsel %vm864, %v1030, %v1016
    %v1032 = vsel %vm866, %v1031, %v1019
    %v1033 = vsel %vm862, %v1001, %v1022
    %v1034 = vsel %vm864, %v1033, %v1025
    %v1035 = vsel %vm866, %v1034, %v1028
    %v1036 = vmul.f32 %v1032, 1.442695
    %v1037 = vpow.pop %v1036
    %v1038 = vmul.f32 %v1035, 1.442695
    %v1039 = vpow.pop %v1038
    %v1040 = vsub.f32 1.0, %v1037
    %v1041 = vsub.f32 1.0, %v1039
    %v1042 = vsel %vm962, -1e+30, %v952
    %v1043 = vsel %vm962, -1e+30, %v957
    %vm1044 = vcmask 130048
    %v1045 = vsel %vm1044, %v1042, -inf
    %1046 = vmax.xlane.f32.xlu0 %v1045
    %v1047 = vpop.xlane.xlu0 %1046
    %v1048 = vsel %vm1044, %v1043, -inf
    %1049 = vmax.xlane.f32.xlu0 %v1048
    %v1050 = vpop.xlane.xlu0 %1049
    %v1051 = vsub.f32 %v1042, %v1047
    %v1052 = vsub.f32 %v1043, %v1050
    %v1053 = vmul.f32 %v1051, 1.442695
    %v1054 = vpow.pop %v1053
    %v1055 = vmul.f32 %v1052, 1.442695
    %v1056 = vpow.pop %v1055
    %1058 = vset.pattern.permute.xlu0 15
    %1059 = vperm.xlu0 %1058, %v1037
    %v1060 = vpop.permute.xlu0 %1059
    %1063 = vset.pattern.permute.xlu0 15
    %1064 = vperm.xlu0 %1063, %v1039
    %v1065 = vpop.permute.xlu0 %1064
    %v1067 = vmul.f32 %v1060, %v1054
    %v1068 = vmul.f32 %v1065, %v1056
    %v1069 = vsel %vm1044, %v1054, 0.0
    %1070 = vadd.xlane.f32.xlu0 %v1069
    %v1071 = vpop.xlane.xlu0 %1070
    %v1072 = vsel %vm1044, %v1056, 0.0
    %1073 = vadd.xlane.f32.xlu0 %v1072
    %v1074 = vpop.xlane.xlu0 %1073
    %v1075 = vrcp.pop %v1071
    %v1076 = vmul.f32 %v1067, %v1075
    %v1077 = vrcp.pop %v1074
    %v1078 = vmul.f32 %v1068, %v1077
    %1080 = vset.pattern.permute.xlu0 15
    %1081 = vperm.xlu0 %1080, %v1040
    %v1082 = vpop.permute.xlu0 %1081
    %1085 = vset.pattern.permute.xlu0 15
    %1086 = vperm.xlu0 %1085, %v1041
    %v1087 = vpop.permute.xlu0 %1086
    %v1089 = vsel %vm962, %v1082, %v1076
    %v1090 = vsel %vm962, %v1087, %v1078
    %v1091 = vmax.f32 %v1089, 1e-10
    %v1092 = vmax.f32 %v1090, 1e-10
    %v1093 = vsel %vm1044, %v1091, 0.0
    %1094 = vadd.xlane.f32.xlu0 %v1093
    %v1095 = vpop.xlane.xlu0 %1094
    %v1096 = vsel %vm1044, %v1092, 0.0
    %1097 = vadd.xlane.f32.xlu0 %v1096
    %v1098 = vpop.xlane.xlu0 %1097
    %v1099 = vrcp.pop %v1095
    %v1100 = vmul.f32 %v1091, %v1099
    %v1101 = vrcp.pop %v1098
    %v1102 = vmul.f32 %v1092, %v1101
    %v1103 = vlog2.pop %v1100
    %v1104 = vmul.f32 %v1103, 0.6931472
    %v1105 = vlog2.pop %v1102
    %v1106 = vmul.f32 %v1105, 0.6931472
    %1107 = vst.msk [vmem:[%s2] sm:$0xff] %vm1044, %v1104
    %1108 = vst.msk [vmem:[%s2 + $0x8] sm:$0xff] %vm1044, %v1106
    // Predicated region
    $region18: #{rnn_lm_st_forward.1} parent=1 // pred_check
      _
    $region19: #{rnn_lm_st_forward.1} parent=1 // pred_check_branch
      %1110 = sbr.rel (0) target = $region21
    $region20: #{rnn_lm_st_forward.1} parent=1 // pred_region
      _
    $region21: #{rnn_lm_st_forward.1} parent=1 // pred_fallthru
      _
    // Predicated region
    $region22: #{rnn_lm_st_forward.1} parent=1 // pred_check
      _
    $region23: #{rnn_lm_st_forward.1} parent=1 // pred_check_branch
      %1112 = sbr.rel (0) target = $region25
    $region24: #{rnn_lm_st_forward.1} parent=1 // pred_region
      _
    $region25: #{rnn_lm_st_forward.1} parent=1 // pred_fallthru
      _
    %1113 = vsyncpa [#allocation3], 1
    %1114 = vsyncpa [#allocation4], 1

</llo_original>
